<compile_context>
chip_gen: v5e
topology: v5e:2x2
jax: 0.10.0
libtpu: 0.0.40
codegen_flags: <defaults>
</compile_context>

<pallas_src>
import functools

import jax
import jax.numpy as jnp
from jax.experimental import pallas as pl
from jax.experimental.pallas import tpu as pltpu


# ----------------------------------------------------------------------------
# Pallas kernel: one GATConv attention + aggregation step for a tile of dst rows.
# ----------------------------------------------------------------------------
def gat_attention_kernel(xw_ref, s_src_ref, bias_ref, s_dst_ref, mask_ref, out_ref,
                         *, heads, out_ch, apply_relu):
    # xw_ref    (N, H*C)  bf16  grid-invariant  (projected features, src side)
    # s_src_ref (H, N)    f32   grid-invariant  (src-side logits, lane-major rows)
    # bias_ref  (1, H*C)  f32   grid-invariant
    # s_dst_ref (TM, H)   f32   dst-row tiled   (dst-side logits)
    # mask_ref  (TM, N)   bf16  dst-row tiled   (0 for edge / -1e30 for no edge)
    # out_ref   (TM, H*C) f32

    # Hoisted once per tile: single bf16->f32 cast, no compare+select in the kernel.
    mask = mask_ref[...].astype(jnp.float32)                      # (TM, N)

    cols = []
    for h in range(heads):                                        # heads is tiny: static unroll
        lo = h * out_ch
        # e[i, j] = LeakyReLU(s_dst[i] + s_src[j]) + mask[i, j]
        e = s_dst_ref[:, h:h + 1] + s_src_ref[h:h + 1, :]         # (TM, 1)+(1, N) -> (TM, N)
        e = jnp.maximum(e, 0.2 * e) + mask                        # LeakyReLU(0.2), 2 VALU ops

        # Row softmax over src nodes j; self-loops guarantee a finite row max,
        # masked entries underflow to 0 after exp.
        m = jnp.max(e, axis=-1, keepdims=True)
        p = jnp.exp(e - m)                                        # (TM, N) un-normalized
        denom = jnp.sum(p, axis=-1, keepdims=True)                # (TM, 1)

        # Aggregate FIRST (MXU, bf16 in / f32 acc), normalize the small result AFTER:
        # a (TM, C) scale instead of a (TM, N) scale on the binding VALU slot.
        agg = jnp.dot(p.astype(jnp.bfloat16), xw_ref[:, lo:lo + out_ch],
                      preferred_element_type=jnp.float32)         # (TM, C)
        cols.append(agg * pl.reciprocal(denom, approx=True)       # EUP reciprocal
                    + bias_ref[0:1, lo:lo + out_ch])

    out = jnp.concatenate(cols, axis=-1)                          # (TM, H*C)
    if apply_relu:
        out = jnp.maximum(out, 0.0)
    out_ref[...] = out                                            # one store per tile


# ----------------------------------------------------------------------------
# Generation-aware VMEM budgeting.
# ----------------------------------------------------------------------------
def _vmem_config():
    cap = 64 * 1024 * 1024                 # conservative fallback: v7x per-TC VMEM
    try:
        cap = int(pltpu.get_tpu_info().vmem_capacity_bytes)
    except Exception:
        pass
    # Leave headroom for compiler-internal scratch/semaphores; never ask for all of it.
    limit = min(int(cap * 0.85), cap - 8 * 1024 * 1024, 100 * 1024 * 1024)
    budget = min(int(cap * 0.70), limit)
    return budget, limit


def _choose_tile(n, hc, heads, budget_bytes):
    """Largest dst-row tile that fits the VMEM budget, capped at n // 4 so the grid
    has >= 4 steps (2-TensorCore sharding on v7x + DMA/compute overlap)."""
    resident = 2 * (n * hc * 2           # xw (bf16), default-double-buffered
                    + heads * n * 4      # s_src (f32)
                    + hc * 4)            # bias
    tm_cap = max(16, n // 4)
    for tm in (1024, 512, 256, 128, 64, 32, 16):
        if tm > tm_cap:
            continue
        per_tile = (2 * tm * n * 2       # mask tile (bf16), double-buffered
                    + 2 * tm * heads * 4 # s_dst tile
                    + 2 * tm * hc * 4    # out tile
                    + 6 * tm * n * 4)    # live f32 (TM, N) temporaries (e, p, ...)
        if resident + per_tile <= budget_bytes:
            return tm
    return 16


# ----------------------------------------------------------------------------
# Wrapper: XLA pre-pass (projection + per-node logits) + one pallas_call per layer.
# ----------------------------------------------------------------------------
def gat_conv(x, params, mask_bias, *, heads, out_ch, apply_relu, residual=None,
             vmem_budget, vmem_limit):
    n = x.shape[0]
    hc = heads * out_ch

    # ---- hoisted per-layer pre-pass (review item #1) --------------------------
    # Residual add, projection and per-node attention logits are O(N*H*C); doing
    # them once here (plain XLA) removes n_tiles-fold redundant MXU/VPU work from
    # the kernel and shrinks grid-invariant VMEM residency to one bf16 slab.
    h_in = x if residual is None else x + residual
    xw = jnp.dot(h_in, params["w"], preferred_element_type=jnp.float32)   # (N, H*C)
    xw_h = xw.reshape(n, heads, out_ch)
    s_src = jnp.einsum("nhc,hc->hn", xw_h, params["att_src"])             # (H, N)
    s_dst = jnp.einsum("nhc,hc->nh", xw_h, params["att_dst"])             # (N, H)
    xw_bf16 = xw.astype(jnp.bfloat16)          # single cast; bf16 end-to-end in-kernel

    tile_m = _choose_tile(n, hc, heads, vmem_budget)
    n_tiles = pl.cdiv(n, tile_m)
    n_pad = n_tiles * tile_m
    if n_pad != n:                             # pad dst rows only; src axis stays = n
        s_dst = jnp.pad(s_dst, ((0, n_pad - n), (0, 0)))
        mask_bias = jnp.pad(mask_bias, ((0, n_pad - n), (0, 0)))

    kernel = functools.partial(gat_attention_kernel, heads=heads, out_ch=out_ch,
                               apply_relu=apply_relu)

    inv = lambda shape: pl.BlockSpec(shape, lambda i: (0, 0))             # grid-invariant
    in_specs = [
        inv((n, hc)),                                      # xw (bf16)
        inv((heads, n)),                                   # s_src
        inv((1, hc)),                                      # bias
        pl.BlockSpec((tile_m, heads), lambda i: (i, 0)),   # s_dst, dst-row tiled
        pl.BlockSpec((tile_m, n), lambda i: (i, 0)),       # mask bias (bf16), streamed
    ]

    # Advisory cost estimate for XLA scheduling of the back-to-back layers.
    flops_tile = heads * (7 * tile_m * n + 2 * tile_m * n * out_ch) + tile_m * hc
    cost = pl.CostEstimate(
        flops=int(n_tiles * flops_tile),
        transcendentals=int(n_tiles * heads * (tile_m * n + tile_m)),
        bytes_accessed=int(2 * n_pad * n + 2 * n * hc
                           + 4 * (heads * n + n_pad * heads + hc + n_pad * hc)),
    )

    out = pl.pallas_call(
        kernel,
        out_shape=jax.ShapeDtypeStruct((n_pad, hc), jnp.float32),
        grid=(n_tiles,),
        in_specs=in_specs,
        out_specs=pl.BlockSpec((tile_m, hc), lambda i: (i, 0)),
        compiler_params=pltpu.CompilerParams(
            dimension_semantics=("parallel",),     # independent dst tiles (megacore-safe)
            vmem_limit_bytes=vmem_limit,
        ),
        cost_estimate=cost,
    )(xw_bf16, s_src, params["bias"], s_dst, mask_bias)

    return out[:n] if n_pad != n else out


# ----------------------------------------------------------------------------
# Parameter construction (deterministic, Glorot-ish init).
# ----------------------------------------------------------------------------
def init_gat_params(key, in_ch, out_ch, heads):
    k_w, k_s, k_d = jax.random.split(key, 3)
    scale = (2.0 / (in_ch + heads * out_ch)) ** 0.5
    return {
        "w": scale * jax.random.normal(k_w, (in_ch, heads * out_ch), jnp.float32),
        "att_src": 0.1 * jax.random.normal(k_s, (heads, out_ch), jnp.float32),
        "att_dst": 0.1 * jax.random.normal(k_d, (heads, out_ch), jnp.float32),
        "bias": jnp.zeros((1, heads * out_ch), jnp.float32),
    }


def build_mask_bias(edge_index, num_nodes):
    # adj[dst, src] = 1.0 ; add self loops (PyG GATConv default add_self_loops=True),
    # then pre-convert to a bf16 additive mask (0 / -1e30): halves the dominant
    # N^2 HBM stream and removes the per-element compare+select from the kernel.
    src, dst = edge_index[0], edge_index[1]
    adj = jnp.zeros((num_nodes, num_nodes), jnp.float32).at[dst, src].set(1.0)
    adj = jnp.maximum(adj, jnp.eye(num_nodes, dtype=jnp.float32))
    return jnp.where(adj > 0.0, 0.0, -1e30).astype(jnp.bfloat16)


# ----------------------------------------------------------------------------
# ResGAT forward (mirrors the PyTorch module; dropout in eval mode = identity).
# Residual adds are fused into the consuming layer's (tiny) XLA pre-pass.
# ----------------------------------------------------------------------------
def resgat_forward(x, mask_bias, params, *, heads):
    hidden = params["conv1"]["att_src"].shape[1]
    budget, limit = _vmem_config()
    conv = functools.partial(gat_conv, heads=heads, out_ch=hidden,
                             vmem_budget=budget, vmem_limit=limit)
    # TODO(synk): training-mode dropout (F.dropout, training=True) is not implemented;
    #             inference semantics (identity) are used.
    x1 = conv(x,  params["conv1"], mask_bias, apply_relu=True)
    x2 = conv(x1, params["conv2"], mask_bias, apply_relu=True)
    x3 = conv(x2, params["conv3"], mask_bias, apply_relu=True, residual=x1)   # conv3(x2 + x1)
    x4 = conv(x2, params["conv4"], mask_bias, apply_relu=True, residual=x3)   # conv4(x2 + x3)
    # NOTE: the reference forward reuses conv4 here (conv5 is never called).
    x5 = conv(x4, params["conv4"], mask_bias, apply_relu=False, residual=x3)  # conv4(x4 + x3)
    return x5


if __name__ == "__main__":
    # Small, self-consistent shapes.  TM is capped at N // 4 = 64, so the grid has
    # 4 dst tiles and the pipeline / parallel-sharding path is actually exercised.
    NUM_NODES = 256
    NUM_FEATURES = 32
    HIDDEN = 8
    HEADS = 2
    NUM_CLASSES = 4
    NUM_EDGES = 1024

    root = jax.random.PRNGKey(0)
    k_x, k_e, k1, k2, k3, k4, k5 = jax.random.split(root, 7)

    x = jax.random.normal(k_x, (NUM_NODES, NUM_FEATURES), jnp.float32)
    edge_index = jax.random.randint(k_e, (2, NUM_EDGES), 0, NUM_NODES, jnp.int32)
    mask_bias = build_mask_bias(edge_index, NUM_NODES)

    params = {
        "conv1": init_gat_params(k1, NUM_FEATURES, HIDDEN, HEADS),
        "conv2": init_gat_params(k2, HIDDEN * HEADS, HIDDEN, HEADS),
        "conv3": init_gat_params(k3, HIDDEN * HEADS, HIDDEN, HEADS),
        "conv4": init_gat_params(k4, HIDDEN * HEADS, HIDDEN, HEADS),
        # conv5 exists in __init__ but is never used in forward; keep for parity.
        "conv5": init_gat_params(k5, HIDDEN * HEADS, NUM_CLASSES, 1),
    }

    out = jax.jit(functools.partial(resgat_forward, heads=HEADS))(x, mask_bias, params)
    jax.block_until_ready(out)
    assert out.shape == (NUM_NODES, HIDDEN * HEADS)
    assert bool(jnp.all(jnp.isfinite(out)))
    print("KERNEL_OK")
</pallas_src>

<mosaic_0001>
module attributes {stable_mosaic.version = 11 : i64} {
  func.func @gat_attention_kernel(%arg0: i32, %arg1: memref<256x16xbf16, #tpu.memory_space<vmem>>, %arg2: memref<2x256xf32, #tpu.memory_space<vmem>>, %arg3: memref<1x16xf32, #tpu.memory_space<vmem>>, %arg4: memref<64x2xf32, #tpu.memory_space<vmem>>, %arg5: memref<64x256xbf16, #tpu.memory_space<vmem>>, %arg6: memref<64x16xf32, #tpu.memory_space<vmem>>) attributes {dimension_semantics = [#tpu.dimension_semantics<parallel>], iteration_bounds = array<i64: 4>, scalar_prefetch = 0 : i64, scratch_operands = 0 : i64, tpu.core_type = #tpu.core_type<tc>, window_params = [{pipeline_mode = #tpu.pipeline_mode<synchronous>, transform_indices = @transform_0, window_bounds = array<i64: 256, 16>}, {pipeline_mode = #tpu.pipeline_mode<synchronous>, transform_indices = @transform_1, window_bounds = array<i64: 2, 256>}, {pipeline_mode = #tpu.pipeline_mode<synchronous>, transform_indices = @transform_2, window_bounds = array<i64: 1, 16>}, {transform_indices = @transform_3, window_bounds = array<i64: 64, 2>}, {transform_indices = @transform_4, window_bounds = array<i64: 64, 256>}, {transform_indices = @transform_5, window_bounds = array<i64: 64, 16>}]} {
    %c0 = arith.constant 0 : index
    %c0_0 = arith.constant 0 : index
    %0 = vector.load %arg5[%c0, %c0_0] : memref<64x256xbf16, #tpu.memory_space<vmem>>, vector<64x256xbf16>
    %1 = arith.extf %0 : vector<64x256xbf16> to vector<64x256xf32>
    %c0_1 = arith.constant 0 : index
    %c0_2 = arith.constant 0 : index
    %2 = vector.load %arg4[%c0_1, %c0_2] : memref<64x2xf32, #tpu.memory_space<vmem>>, vector<64x1xf32>
    %c0_3 = arith.constant 0 : index
    %c0_4 = arith.constant 0 : index
    %3 = vector.load %arg2[%c0_3, %c0_4] : memref<2x256xf32, #tpu.memory_space<vmem>>, vector<1x256xf32>
    %4 = vector.broadcast %2 : vector<64x1xf32> to vector<64x256xf32>
    %5 = vector.broadcast %3 : vector<1x256xf32> to vector<64x256xf32>
    %6 = arith.addf %4, %5 : vector<64x256xf32>
    %cst = arith.constant 2.000000e-01 : f32
    %7 = vector.broadcast %cst : f32 to vector<64x256xf32>
    %8 = arith.mulf %7, %6 : vector<64x256xf32>
    %9 = arith.maximumf %6, %8 : vector<64x256xf32>
    %10 = arith.addf %9, %1 : vector<64x256xf32>
    %cst_5 = arith.constant dense<0xFF800000> : vector<64xf32>
    %11 = vector.multi_reduction <maximumf>, %10, %cst_5 [1] : vector<64x256xf32> to vector<64xf32>
    %12 = vector.shape_cast %11 : vector<64xf32> to vector<64x1xf32>
    %13 = vector.broadcast %12 : vector<64x1xf32> to vector<64x256xf32>
    %14 = arith.subf %10, %13 : vector<64x256xf32>
    %15 = math.exp %14 : vector<64x256xf32>
    %cst_6 = arith.constant dense<0.000000e+00> : vector<64xf32>
    %16 = vector.multi_reduction <add>, %15, %cst_6 [1] : vector<64x256xf32> to vector<64xf32>
    %17 = vector.shape_cast %16 : vector<64xf32> to vector<64x1xf32>
    %18 = arith.truncf %15 : vector<64x256xf32> to vector<64x256xbf16>
    %c0_7 = arith.constant 0 : index
    %c0_8 = arith.constant 0 : index
    %19 = vector.load %arg1[%c0_7, %c0_8] : memref<256x16xbf16, #tpu.memory_space<vmem>>, vector<256x8xbf16>
    %cst_9 = arith.constant dense<0.000000e+00> : vector<64x8xf32>
    %20 = tpu.matmul %18, %19, %cst_9 {dimension_numbers = #tpu.dot_dimension_numbers<[1], [0], [0], [1], [0, 0, 1, 1], [], []>} : vector<64x256xbf16>, vector<256x8xbf16>, vector<64x8xf32> -> vector<64x8xf32>
    %21 = tpu.reciprocal %17 {approx = true} : vector<64x1xf32> -> vector<64x1xf32>
    %22 = vector.broadcast %21 : vector<64x1xf32> to vector<64x8xf32>
    %23 = arith.mulf %20, %22 : vector<64x8xf32>
    %c0_10 = arith.constant 0 : index
    %c0_11 = arith.constant 0 : index
    %24 = vector.load %arg3[%c0_10, %c0_11] : memref<1x16xf32, #tpu.memory_space<vmem>>, vector<1x8xf32>
    %25 = vector.broadcast %24 : vector<1x8xf32> to vector<64x8xf32>
    %26 = arith.addf %23, %25 : vector<64x8xf32>
    %c0_12 = arith.constant 0 : index
    %c1 = arith.constant 1 : index
    %27 = vector.load %arg4[%c0_12, %c1] : memref<64x2xf32, #tpu.memory_space<vmem>>, vector<64x1xf32>
    %c1_13 = arith.constant 1 : index
    %c0_14 = arith.constant 0 : index
    %28 = vector.load %arg2[%c1_13, %c0_14] : memref<2x256xf32, #tpu.memory_space<vmem>>, vector<1x256xf32>
    %29 = vector.broadcast %27 : vector<64x1xf32> to vector<64x256xf32>
    %30 = vector.broadcast %28 : vector<1x256xf32> to vector<64x256xf32>
    %31 = arith.addf %29, %30 : vector<64x256xf32>
    %cst_15 = arith.constant 2.000000e-01 : f32
    %32 = vector.broadcast %cst_15 : f32 to vector<64x256xf32>
    %33 = arith.mulf %32, %31 : vector<64x256xf32>
    %34 = arith.maximumf %31, %33 : vector<64x256xf32>
    %35 = arith.addf %34, %1 : vector<64x256xf32>
    %cst_16 = arith.constant dense<0xFF800000> : vector<64xf32>
    %36 = vector.multi_reduction <maximumf>, %35, %cst_16 [1] : vector<64x256xf32> to vector<64xf32>
    %37 = vector.shape_cast %36 : vector<64xf32> to vector<64x1xf32>
    %38 = vector.broadcast %37 : vector<64x1xf32> to vector<64x256xf32>
    %39 = arith.subf %35, %38 : vector<64x256xf32>
    %40 = math.exp %39 : vector<64x256xf32>
    %cst_17 = arith.constant dense<0.000000e+00> : vector<64xf32>
    %41 = vector.multi_reduction <add>, %40, %cst_17 [1] : vector<64x256xf32> to vector<64xf32>
    %42 = vector.shape_cast %41 : vector<64xf32> to vector<64x1xf32>
    %43 = arith.truncf %40 : vector<64x256xf32> to vector<64x256xbf16>
    %c0_18 = arith.constant 0 : index
    %c8 = arith.constant 8 : index
    %44 = vector.load %arg1[%c0_18, %c8] : memref<256x16xbf16, #tpu.memory_space<vmem>>, vector<256x8xbf16>
    %cst_19 = arith.constant dense<0.000000e+00> : vector<64x8xf32>
    %45 = tpu.matmul %43, %44, %cst_19 {dimension_numbers = #tpu.dot_dimension_numbers<[1], [0], [0], [1], [0, 0, 1, 1], [], []>} : vector<64x256xbf16>, vector<256x8xbf16>, vector<64x8xf32> -> vector<64x8xf32>
    %46 = tpu.reciprocal %42 {approx = true} : vector<64x1xf32> -> vector<64x1xf32>
    %47 = vector.broadcast %46 : vector<64x1xf32> to vector<64x8xf32>
    %48 = arith.mulf %45, %47 : vector<64x8xf32>
    %c0_20 = arith.constant 0 : index
    %c8_21 = arith.constant 8 : index
    %49 = vector.load %arg3[%c0_20, %c8_21] : memref<1x16xf32, #tpu.memory_space<vmem>>, vector<1x8xf32>
    %50 = vector.broadcast %49 : vector<1x8xf32> to vector<64x8xf32>
    %51 = arith.addf %48, %50 : vector<64x8xf32>
    %52 = tpu.concatenate %26, %51 in 1 : vector<64x8xf32>, vector<64x8xf32> -> vector<64x16xf32>
    %c0_22 = arith.constant 0 : index
    %c0_23 = arith.constant 0 : index
    %53 = vector.load %arg6[%c0_22, %c0_23] : memref<64x16xf32, #tpu.memory_space<vmem>>, vector<64x16xf32>
    tpu.vector_store %arg6[%c0_22, %c0_23], %52 {strides = array<i32>} : memref<64x16xf32, #tpu.memory_space<vmem>>, vector<64x16xf32>,
    return
  }
  func.func @transform_0(%arg0: i32) -> (i32, i32) {
    %c0_i32 = arith.constant 0 : i32
    %c0_i32_0 = arith.constant 0 : i32
    %c0_i32_1 = arith.constant 0 : i32
    return %c0_i32, %c0_i32_0 : i32, i32
  }
  func.func @transform_1(%arg0: i32) -> (i32, i32) {
    %c0_i32 = arith.constant 0 : i32
    %c0_i32_0 = arith.constant 0 : i32
    %c0_i32_1 = arith.constant 0 : i32
    return %c0_i32, %c0_i32_0 : i32, i32
  }
  func.func @transform_2(%arg0: i32) -> (i32, i32) {
    %c0_i32 = arith.constant 0 : i32
    %c0_i32_0 = arith.constant 0 : i32
    %c0_i32_1 = arith.constant 0 : i32
    return %c0_i32, %c0_i32_0 : i32, i32
  }
  func.func @transform_3(%arg0: i32) -> (i32, i32) {
    %c0_i32 = arith.constant 0 : i32
    %c0_i32_0 = arith.constant 0 : i32
    return %arg0, %c0_i32 : i32, i32
  }
  func.func @transform_4(%arg0: i32) -> (i32, i32) {
    %c0_i32 = arith.constant 0 : i32
    %c0_i32_0 = arith.constant 0 : i32
    return %arg0, %c0_i32 : i32, i32
  }
  func.func @transform_5(%arg0: i32) -> (i32, i32) {
    %c0_i32 = arith.constant 0 : i32
    %c0_i32_0 = arith.constant 0 : i32
    return %arg0, %c0_i32 : i32, i32
  }
}

module attributes {stable_mosaic.version = 11 : i64} {
  func.func @gat_attention_kernel(%arg0: i32, %arg1: memref<256x16xbf16, #tpu.memory_space<vmem>>, %arg2: memref<2x256xf32, #tpu.memory_space<vmem>>, %arg3: memref<1x16xf32, #tpu.memory_space<vmem>>, %arg4: memref<64x2xf32, #tpu.memory_space<vmem>>, %arg5: memref<64x256xbf16, #tpu.memory_space<vmem>>, %arg6: memref<64x16xf32, #tpu.memory_space<vmem>>) attributes {dimension_semantics = [#tpu.dimension_semantics<parallel>], iteration_bounds = array<i64: 4>, scalar_prefetch = 0 : i64, scratch_operands = 0 : i64, tpu.core_type = #tpu.core_type<tc>, window_params = [{pipeline_mode = #tpu.pipeline_mode<synchronous>, transform_indices = @transform_0, window_bounds = array<i64: 256, 16>}, {pipeline_mode = #tpu.pipeline_mode<synchronous>, transform_indices = @transform_1, window_bounds = array<i64: 2, 256>}, {pipeline_mode = #tpu.pipeline_mode<synchronous>, transform_indices = @transform_2, window_bounds = array<i64: 1, 16>}, {transform_indices = @transform_3, window_bounds = array<i64: 64, 2>}, {transform_indices = @transform_4, window_bounds = array<i64: 64, 256>}, {transform_indices = @transform_5, window_bounds = array<i64: 64, 16>}]} {
    %c0 = arith.constant 0 : index
    %c0_0 = arith.constant 0 : index
    %0 = vector.load %arg5[%c0, %c0_0] : memref<64x256xbf16, #tpu.memory_space<vmem>>, vector<64x256xbf16>
    %1 = arith.extf %0 : vector<64x256xbf16> to vector<64x256xf32>
    %c0_1 = arith.constant 0 : index
    %c0_2 = arith.constant 0 : index
    %2 = vector.load %arg4[%c0_1, %c0_2] : memref<64x2xf32, #tpu.memory_space<vmem>>, vector<64x1xf32>
    %c0_3 = arith.constant 0 : index
    %c0_4 = arith.constant 0 : index
    %3 = vector.load %arg2[%c0_3, %c0_4] : memref<2x256xf32, #tpu.memory_space<vmem>>, vector<1x256xf32>
    %4 = vector.broadcast %2 : vector<64x1xf32> to vector<64x256xf32>
    %5 = vector.broadcast %3 : vector<1x256xf32> to vector<64x256xf32>
    %6 = arith.addf %4, %5 : vector<64x256xf32>
    %cst = arith.constant 2.000000e-01 : f32
    %7 = vector.broadcast %cst : f32 to vector<64x256xf32>
    %8 = arith.mulf %7, %6 : vector<64x256xf32>
    %9 = arith.maximumf %6, %8 : vector<64x256xf32>
    %10 = arith.addf %9, %1 : vector<64x256xf32>
    %cst_5 = arith.constant dense<0xFF800000> : vector<64xf32>
    %11 = vector.multi_reduction <maximumf>, %10, %cst_5 [1] : vector<64x256xf32> to vector<64xf32>
    %12 = vector.shape_cast %11 : vector<64xf32> to vector<64x1xf32>
    %13 = vector.broadcast %12 : vector<64x1xf32> to vector<64x256xf32>
    %14 = arith.subf %10, %13 : vector<64x256xf32>
    %15 = math.exp %14 : vector<64x256xf32>
    %cst_6 = arith.constant dense<0.000000e+00> : vector<64xf32>
    %16 = vector.multi_reduction <add>, %15, %cst_6 [1] : vector<64x256xf32> to vector<64xf32>
    %17 = vector.shape_cast %16 : vector<64xf32> to vector<64x1xf32>
    %18 = arith.truncf %15 : vector<64x256xf32> to vector<64x256xbf16>
    %c0_7 = arith.constant 0 : index
    %c0_8 = arith.constant 0 : index
    %19 = vector.load %arg1[%c0_7, %c0_8] : memref<256x16xbf16, #tpu.memory_space<vmem>>, vector<256x8xbf16>
    %cst_9 = arith.constant dense<0.000000e+00> : vector<64x8xf32>
    %20 = tpu.matmul %18, %19, %cst_9 {dimension_numbers = #tpu.dot_dimension_numbers<[1], [0], [0], [1], [0, 0, 1, 1], [], []>} : vector<64x256xbf16>, vector<256x8xbf16>, vector<64x8xf32> -> vector<64x8xf32>
    %21 = tpu.reciprocal %17 {approx = true} : vector<64x1xf32> -> vector<64x1xf32>
    %22 = vector.broadcast %21 : vector<64x1xf32> to vector<64x8xf32>
    %23 = arith.mulf %20, %22 : vector<64x8xf32>
    %c0_10 = arith.constant 0 : index
    %c0_11 = arith.constant 0 : index
    %24 = vector.load %arg3[%c0_10, %c0_11] : memref<1x16xf32, #tpu.memory_space<vmem>>, vector<1x8xf32>
    %25 = vector.broadcast %24 : vector<1x8xf32> to vector<64x8xf32>
    %26 = arith.addf %23, %25 : vector<64x8xf32>
    %c0_12 = arith.constant 0 : index
    %c1 = arith.constant 1 : index
    %27 = vector.load %arg4[%c0_12, %c1] : memref<64x2xf32, #tpu.memory_space<vmem>>, vector<64x1xf32>
    %c1_13 = arith.constant 1 : index
    %c0_14 = arith.constant 0 : index
    %28 = vector.load %arg2[%c1_13, %c0_14] : memref<2x256xf32, #tpu.memory_space<vmem>>, vector<1x256xf32>
    %29 = vector.broadcast %27 : vector<64x1xf32> to vector<64x256xf32>
    %30 = vector.broadcast %28 : vector<1x256xf32> to vector<64x256xf32>
    %31 = arith.addf %29, %30 : vector<64x256xf32>
    %cst_15 = arith.constant 2.000000e-01 : f32
    %32 = vector.broadcast %cst_15 : f32 to vector<64x256xf32>
    %33 = arith.mulf %32, %31 : vector<64x256xf32>
    %34 = arith.maximumf %31, %33 : vector<64x256xf32>
    %35 = arith.addf %34, %1 : vector<64x256xf32>
    %cst_16 = arith.constant dense<0xFF800000> : vector<64xf32>
    %36 = vector.multi_reduction <maximumf>, %35, %cst_16 [1] : vector<64x256xf32> to vector<64xf32>
    %37 = vector.shape_cast %36 : vector<64xf32> to vector<64x1xf32>
    %38 = vector.broadcast %37 : vector<64x1xf32> to vector<64x256xf32>
    %39 = arith.subf %35, %38 : vector<64x256xf32>
    %40 = math.exp %39 : vector<64x256xf32>
    %cst_17 = arith.constant dense<0.000000e+00> : vector<64xf32>
    %41 = vector.multi_reduction <add>, %40, %cst_17 [1] : vector<64x256xf32> to vector<64xf32>
    %42 = vector.shape_cast %41 : vector<64xf32> to vector<64x1xf32>
    %43 = arith.truncf %40 : vector<64x256xf32> to vector<64x256xbf16>
    %c0_18 = arith.constant 0 : index
    %c8 = arith.constant 8 : index
    %44 = vector.load %arg1[%c0_18, %c8] : memref<256x16xbf16, #tpu.memory_space<vmem>>, vector<256x8xbf16>
    %cst_19 = arith.constant dense<0.000000e+00> : vector<64x8xf32>
    %45 = tpu.matmul %43, %44, %cst_19 {dimension_numbers = #tpu.dot_dimension_numbers<[1], [0], [0], [1], [0, 0, 1, 1], [], []>} : vector<64x256xbf16>, vector<256x8xbf16>, vector<64x8xf32> -> vector<64x8xf32>
    %46 = tpu.reciprocal %42 {approx = true} : vector<64x1xf32> -> vector<64x1xf32>
    %47 = vector.broadcast %46 : vector<64x1xf32> to vector<64x8xf32>
    %48 = arith.mulf %45, %47 : vector<64x8xf32>
    %c0_20 = arith.constant 0 : index
    %c8_21 = arith.constant 8 : index
    %49 = vector.load %arg3[%c0_20, %c8_21] : memref<1x16xf32, #tpu.memory_space<vmem>>, vector<1x8xf32>
    %50 = vector.broadcast %49 : vector<1x8xf32> to vector<64x8xf32>
    %51 = arith.addf %48, %50 : vector<64x8xf32>
    %52 = tpu.concatenate %26, %51 in 1 : vector<64x8xf32>, vector<64x8xf32> -> vector<64x16xf32>
    %cst_22 = arith.constant 0.000000e+00 : f32
    %53 = vector.broadcast %cst_22 : f32 to vector<64x16xf32>
    %54 = arith.maximumf %52, %53 : vector<64x16xf32>
    %c0_23 = arith.constant 0 : index
    %c0_24 = arith.constant 0 : index
    %55 = vector.load %arg6[%c0_23, %c0_24] : memref<64x16xf32, #tpu.memory_space<vmem>>, vector<64x16xf32>
    tpu.vector_store %arg6[%c0_23, %c0_24], %54 {strides = array<i32>} : memref<64x16xf32, #tpu.memory_space<vmem>>, vector<64x16xf32>,
    return
  }
  func.func @transform_0(%arg0: i32) -> (i32, i32) {
    %c0_i32 = arith.constant 0 : i32
    %c0_i32_0 = arith.constant 0 : i32
    %c0_i32_1 = arith.constant 0 : i32
    return %c0_i32, %c0_i32_0 : i32, i32
  }
  func.func @transform_1(%arg0: i32) -> (i32, i32) {
    %c0_i32 = arith.constant 0 : i32
    %c0_i32_0 = arith.constant 0 : i32
    %c0_i32_1 = arith.constant 0 : i32
    return %c0_i32, %c0_i32_0 : i32, i32
  }
  func.func @transform_2(%arg0: i32) -> (i32, i32) {
    %c0_i32 = arith.constant 0 : i32
    %c0_i32_0 = arith.constant 0 : i32
    %c0_i32_1 = arith.constant 0 : i32
    return %c0_i32, %c0_i32_0 : i32, i32
  }
  func.func @transform_3(%arg0: i32) -> (i32, i32) {
    %c0_i32 = arith.constant 0 : i32
    %c0_i32_0 = arith.constant 0 : i32
    return %arg0, %c0_i32 : i32, i32
  }
  func.func @transform_4(%arg0: i32) -> (i32, i32) {
    %c0_i32 = arith.constant 0 : i32
    %c0_i32_0 = arith.constant 0 : i32
    return %arg0, %c0_i32 : i32, i32
  }
  func.func @transform_5(%arg0: i32) -> (i32, i32) {
    %c0_i32 = arith.constant 0 : i32
    %c0_i32_0 = arith.constant 0 : i32
    return %arg0, %c0_i32 : i32, i32
  }
}

</mosaic_0001>

<llo_original>
// kernel: resgat_forward.5
$region0: #{resgat_forward.5}
  #allocation0 [shape = 'u32[]', space=smem, size = 0x4, offset = 0x4, fixed_abs, tag = 'smem constant byte address 0x4 - core index']
  #allocation1 [shape = 'u32[72,128]{1,0:T(1,128)}', space=vmem, size = 0x9000, scoped, tag = 'internal scratch']
  %s0 = inlined_call_operand.vmem [shape: bf16[256,16], index: 0, kind: input, shape index: {}]
  %s1 = inlined_call_operand.vmem [shape: f32[2,256], index: 1, kind: input, shape index: {}]
  %s2 = inlined_call_operand.vmem [shape: f32[1,16], index: 2, kind: input, shape index: {}]
  %s3 = inlined_call_operand.vmem [shape: f32[256,2], index: 3, kind: input, shape index: {}]
  %s4 = inlined_call_operand.vmem [shape: bf16[256,256], index: 4, kind: input, shape index: {}]
  %s5 = inlined_call_operand.vmem [shape: f32[256,16], index: 5, kind: output, shape index: {}]
  %s6 = sld [smem:[#allocation0]]
  $region53: #{resgat_forward.5} parent=0
    _
  %s8 = ssub.s32 1, %s6
  %s9 = scalar_select 0, %s8, %s6
  loop: start=0, step=1, limit=6
  $region2: #{resgat_forward.5} parent=0 // loop_pre_header
    _
  $region3: #{resgat_forward.5} parent=0 // loop_header
    %s11 = sphi 0, %s15
    %p12 = scmp.ge.s32.totalorder %s11, 6
    %s19 = sphi 0, %s19
    %s21 = sphi 0, %s19
    %s22 = sphi 0, %s21
    %s36 = sphi 0, %s22
    %s40 = sphi 0, %s40
    %s42 = sphi 0, %s40
    %s43 = sphi 0, %s42
    %s57 = sphi 0, %s43
    %s61 = sphi 0, %s61
    %s63 = sphi 0, %s61
    %s64 = sphi 0, %s63
    %s78 = sphi 0, %s64
    %s84 = sphi 0, %s86
    %s87 = sphi 0, %s84
    %s88 = sphi 0, %s87
    %s104 = sphi 0, %s88
    %s110 = sphi 0, %s112
    %s113 = sphi 0, %s110
    %s114 = sphi 0, %s113
    %s130 = sphi 0, %s114
    %s136 = sphi 0, %s138
    %s139 = sphi 0, %s136
    %s140 = sphi 0, %s139
    %s156 = sphi 0, %s140
  $region4: #{resgat_forward.5} parent=0 // loop_header_branch
    %14 = sbr.rel (%p12) target = $region8
  $region5: #{resgat_forward.5} parent=0 // loop_body
    %s16 = ssub.s32 %s11, 1
    %s17 = ssub.s32 %s11, 2
    %s18 = sadd.s32 %s11, 1
    %s20 = sadd.s32 %s19, 1
    %p23 = scmp.eq.s32.totalorder %s11, 3
    %p24 = scmp.ne.s32.totalorder %s19, %s21
    %p25 = scmp.eq.s32.totalorder %s11, 0
    %p26 = por %p24, %p25
    %p27 = scmp.ne.s32.totalorder %s19, %s21
    %p28 = scmp.eq.s32.totalorder %s16, 3
    %p29 = por %p27, %p28
    %p30 = scmp.ne.s32.totalorder %s21, %s22
    %p31 = scmp.eq.s32.totalorder %s16, 0
    %p32 = por %p30, %p31
    %p33 = scmp.ne.s32.totalorder %s21, %s22
    %p34 = scmp.eq.s32.totalorder %s17, 3
    %p35 = por %p33, %p34
    %p37 = scmp.ne.s32.totalorder %s22, %s36
    %p38 = scmp.eq.s32.totalorder %s17, 0
    %p39 = por %p37, %p38
    %s41 = sadd.s32 %s40, 1
    %p44 = scmp.eq.s32.totalorder %s11, 3
    %p45 = scmp.ne.s32.totalorder %s40, %s42
    %p46 = scmp.eq.s32.totalorder %s11, 0
    %p47 = por %p45, %p46
    %p48 = scmp.ne.s32.totalorder %s40, %s42
    %p49 = scmp.eq.s32.totalorder %s16, 3
    %p50 = por %p48, %p49
    %p51 = scmp.ne.s32.totalorder %s42, %s43
    %p52 = scmp.eq.s32.totalorder %s16, 0
    %p53 = por %p51, %p52
    %p54 = scmp.ne.s32.totalorder %s42, %s43
    %p55 = scmp.eq.s32.totalorder %s17, 3
    %p56 = por %p54, %p55
    %p58 = scmp.ne.s32.totalorder %s43, %s57
    %p59 = scmp.eq.s32.totalorder %s17, 0
    %p60 = por %p58, %p59
    %s62 = sadd.s32 %s61, 1
    %p65 = scmp.eq.s32.totalorder %s11, 3
    %p66 = scmp.ne.s32.totalorder %s61, %s63
    %p67 = scmp.eq.s32.totalorder %s11, 0
    %p68 = por %p66, %p67
    %p69 = scmp.ne.s32.totalorder %s61, %s63
    %p70 = scmp.eq.s32.totalorder %s16, 3
    %p71 = por %p69, %p70
    %p72 = scmp.ne.s32.totalorder %s63, %s64
    %p73 = scmp.eq.s32.totalorder %s16, 0
    %p74 = por %p72, %p73
    %p75 = scmp.ne.s32.totalorder %s63, %s64
    %p76 = scmp.eq.s32.totalorder %s17, 3
    %p77 = por %p75, %p76
    %p79 = scmp.ne.s32.totalorder %s64, %s78
    %p80 = scmp.eq.s32.totalorder %s17, 0
    %p81 = por %p79, %p80
    %s82 = ssub.s32 %s11, %s18
    %p83 = scmp.eq.s32.totalorder %s82, 0
    %s85 = sadd.s32 %s84, 1
    %s86 = scalar_select %p83, %s84, %s85
    %p89 = pneg %p83
    %p90 = scmp.eq.s32.totalorder %s11, 3
    %p91 = por %p89, %p90
    %p92 = scmp.ne.s32.totalorder %s84, %s87
    %p93 = scmp.eq.s32.totalorder %s11, 0
    %p94 = por %p92, %p93
    %p95 = scmp.ne.s32.totalorder %s84, %s87
    %p96 = scmp.eq.s32.totalorder %s16, 3
    %p97 = por %p95, %p96
    %p98 = scmp.ne.s32.totalorder %s87, %s88
    %p99 = scmp.eq.s32.totalorder %s16, 0
    %p100 = por %p98, %p99
    %p101 = scmp.ne.s32.totalorder %s87, %s88
    %p102 = scmp.eq.s32.totalorder %s17, 3
    %p103 = por %p101, %p102
    %p105 = scmp.ne.s32.totalorder %s88, %s104
    %p106 = scmp.eq.s32.totalorder %s17, 0
    %p107 = por %p105, %p106
    %s108 = ssub.s32 %s11, %s18
    %p109 = scmp.eq.s32.totalorder %s108, 0
    %s111 = sadd.s32 %s110, 1
    %s112 = scalar_select %p109, %s110, %s111
    %p115 = pneg %p109
    %p116 = scmp.eq.s32.totalorder %s11, 3
    %p117 = por %p115, %p116
    %p118 = scmp.ne.s32.totalorder %s110, %s113
    %p119 = scmp.eq.s32.totalorder %s11, 0
    %p120 = por %p118, %p119
    %p121 = scmp.ne.s32.totalorder %s110, %s113
    %p122 = scmp.eq.s32.totalorder %s16, 3
    %p123 = por %p121, %p122
    %p124 = scmp.ne.s32.totalorder %s113, %s114
    %p125 = scmp.eq.s32.totalorder %s16, 0
    %p126 = por %p124, %p125
    %p127 = scmp.ne.s32.totalorder %s113, %s114
    %p128 = scmp.eq.s32.totalorder %s17, 3
    %p129 = por %p127, %p128
    %p131 = scmp.ne.s32.totalorder %s114, %s130
    %p132 = scmp.eq.s32.totalorder %s17, 0
    %p133 = por %p131, %p132
    %s134 = ssub.s32 %s11, %s18
    %p135 = scmp.eq.s32.totalorder %s134, 0
    %s137 = sadd.s32 %s136, 1
    %s138 = scalar_select %p135, %s136, %s137
    %p141 = pneg %p135
    %p142 = scmp.eq.s32.totalorder %s11, 3
    %p143 = por %p141, %p142
    %p144 = scmp.ne.s32.totalorder %s136, %s139
    %p145 = scmp.eq.s32.totalorder %s11, 0
    %p146 = por %p144, %p145
    %p147 = scmp.ne.s32.totalorder %s136, %s139
    %p148 = scmp.eq.s32.totalorder %s16, 3
    %p149 = por %p147, %p148
    %p150 = scmp.ne.s32.totalorder %s139, %s140
    %p151 = scmp.eq.s32.totalorder %s16, 0
    %p152 = por %p150, %p151
    %p153 = scmp.ne.s32.totalorder %s139, %s140
    %p154 = scmp.eq.s32.totalorder %s17, 3
    %p155 = por %p153, %p154
    %p157 = scmp.ne.s32.totalorder %s140, %s156
    %p158 = scmp.eq.s32.totalorder %s17, 0
    %p159 = por %p157, %p158
    %p160 = scmp.le.s32.totalorder 1, %s11
    %p161 = scmp.lt.s32.totalorder %s11, 5
    %p162 = pnand %p160, %p161
    %p163 = pneg %p162
    // Predicated region
    $region9: #{resgat_forward.5} parent=5 // pred_check
      _
    $region10: #{resgat_forward.5} parent=5 // pred_check_branch
      %165 = sbr.rel (%p162) target = $region12
    $region11: #{resgat_forward.5} parent=5 // pred_region
      %s166 = ssub.s32 %s11, 1
      // Predicated region
      $region13: #{resgat_forward.5} parent=11 // pred_check
        %p167 = pneg %p32
      $region14: #{resgat_forward.5} parent=11 // pred_check_branch
        %169 = sbr.rel (%p167) target = $region16
      $region15: #{resgat_forward.5} parent=11 // pred_region
        _
      $region16: #{resgat_forward.5} parent=11 // pred_fallthru
        _
      // Predicated region
      $region17: #{resgat_forward.5} parent=11 // pred_check
        %p170 = pneg %p53
      $region18: #{resgat_forward.5} parent=11 // pred_check_branch
        %172 = sbr.rel (%p170) target = $region20
      $region19: #{resgat_forward.5} parent=11 // pred_region
        _
      $region20: #{resgat_forward.5} parent=11 // pred_fallthru
        _
      // Predicated region
      $region21: #{resgat_forward.5} parent=11 // pred_check
        %p173 = pneg %p74
      $region22: #{resgat_forward.5} parent=11 // pred_check_branch
        %175 = sbr.rel (%p173) target = $region24
      $region23: #{resgat_forward.5} parent=11 // pred_region
        _
      $region24: #{resgat_forward.5} parent=11 // pred_fallthru
        _
    $region12: #{resgat_forward.5} parent=5 // pred_fallthru
      _
    %p176 = scmp.lt.s32.totalorder %s11, 4
    // Predicated region
    $region25: #{resgat_forward.5} parent=5 // pred_check
      %p177 = pneg %p176
    $region26: #{resgat_forward.5} parent=5 // pred_check_branch
      %179 = sbr.rel (%p177) target = $region28
    $region27: #{resgat_forward.5} parent=5 // pred_region
      // Predicated region
      $region29: #{resgat_forward.5} parent=27 // pred_check
        %p180 = pneg %p94
      $region30: #{resgat_forward.5} parent=27 // pred_check_branch
        %182 = sbr.rel (%p180) target = $region32
      $region31: #{resgat_forward.5} parent=27 // pred_region
        %s183 = smul.u32 8, %s11
        %p184 = scmp.lt.s32.totalorder %s183, 31
        %s185 = scalar_select %p184, %s183, 31
        %s186 = smul.addr %s185, 8
        %s187 = scalar_lea.vmem %s3, %s186
        %s188 = smul.u32 8, %s11
      $region32: #{resgat_forward.5} parent=27 // pred_fallthru
        _
      // Predicated region
      $region33: #{resgat_forward.5} parent=27 // pred_check
        %p189 = pneg %p120
      $region34: #{resgat_forward.5} parent=27 // pred_check_branch
        %191 = sbr.rel (%p189) target = $region36
      $region35: #{resgat_forward.5} parent=27 // pred_region
        %s192 = smul.u32 8, %s11
        %p193 = scmp.lt.s32.totalorder %s192, 31
        %s194 = scalar_select %p193, %s192, 31
        %s195 = smul.addr %s194, 2
        %s196 = smul.addr %s195, 4
        %s197 = scalar_lea.vmem %s4, %s196
        %s198 = smul.u32 8, %s11
      $region36: #{resgat_forward.5} parent=27 // pred_fallthru
        _
    $region28: #{resgat_forward.5} parent=5 // pred_fallthru
      _
    %p199 = scmp.le.s32.totalorder 1, %s11
    %p200 = scmp.lt.s32.totalorder %s11, 5
    %p201 = pnand %p199, %p200
    %p202 = pneg %p201
    // Predicated region
    $region37: #{resgat_forward.5} parent=5 // pred_check
      _
    $region38: #{resgat_forward.5} parent=5 // pred_check_branch
      %204 = sbr.rel (%p201) target = $region40
    $region39: #{resgat_forward.5} parent=5 // pred_region
      %s205 = ssub.s32 %s11, 1
      %p206 = pneg %p32
      %p207 = pneg %p29
      %p208 = pneg %p53
      %p209 = pneg %p50
      %p210 = pneg %p74
      %p211 = pneg %p71
      %s212 = smul.u32 8, %s16
      %p213 = scmp.lt.s32.totalorder %s212, 31
      %s214 = scalar_select %p213, %s212, 31
      %s215 = smul.addr %s214, 8
      %s216 = scalar_lea.vmem %s3, %s215
      %p217 = pneg %p100
      %p218 = pneg %p97
      %s219 = smul.u32 8, %s16
      %p220 = scmp.lt.s32.totalorder %s219, 31
      %s221 = scalar_select %p220, %s219, 31
      %s222 = smul.addr %s221, 2
      %s223 = smul.addr %s222, 4
      %s224 = scalar_lea.vmem %s4, %s223
      %p225 = pneg %p126
      %p226 = pneg %p123
      %p227 = pneg %p152
      %p228 = pneg %p149
      %s229 = smul.u32 8, %s16
      %p230 = scmp.lt.s32.totalorder %s229, 31
      %s231 = scalar_select %p230, %s229, 31
      %s232 = smul.addr %s231, 8
      %s233 = scalar_lea.vmem %s5, %s232
      %s234 = smul.u32 8, %s16
      %p235 = scmp.lt.s32.totalorder %s234, 31
      %s236 = scalar_select %p235, %s234, 31
      %s237 = smul.addr %s236, 8
      %s238 = scalar_lea.vmem %s3, %s237
      %s239 = smul.u32 8, %s16
      %s240 = smul.u32 8, %s16
      %p241 = scmp.lt.s32.totalorder %s240, 31
      %s242 = scalar_select %p241, %s240, 31
      %s243 = smul.addr %s242, 2
      %s244 = smul.addr %s243, 4
      %s245 = scalar_lea.vmem %s4, %s244
      %s246 = smul.u32 8, %s16
      %s247 = smul.u32 8, %s16
      %p248 = scmp.lt.s32.totalorder %s247, 31
      %s249 = scalar_select %p248, %s247, 31
      %s250 = smul.addr %s249, 8
      %s251 = scalar_lea.vmem %s5, %s250
      %s252 = smul.u32 8, %s16
      %v253 = vld [vmem:[%s245] sm:$0xff]
      %v254 = vld [vmem:[%s245 + $0x8] sm:$0xff]
      %v255 = vld [vmem:[%s245 + $0x10] sm:$0xff]
      %v256 = vld [vmem:[%s245 + $0x18] sm:$0xff]
      %v257 = vld [vmem:[%s245 + $0x20] sm:$0xff]
      %v258 = vld [vmem:[%s245 + $0x28] sm:$0xff]
      %v259 = vld [vmem:[%s245 + $0x30] sm:$0xff]
      %v260 = vld [vmem:[%s245 + $0x38] sm:$0xff]
      %v261 = vunpack.c.l.bf16 %v253
      %v262 = vunpack.c.h.bf16 %v253
      %v263 = vunpack.c.l.bf16 %v254
      %v264 = vunpack.c.h.bf16 %v254
      %v265 = vunpack.c.l.bf16 %v255
      %v266 = vunpack.c.h.bf16 %v255
      %v267 = vunpack.c.l.bf16 %v256
      %v268 = vunpack.c.h.bf16 %v256
      %v269 = vunpack.c.l.bf16 %v257
      %v270 = vunpack.c.h.bf16 %v257
      %v271 = vunpack.c.l.bf16 %v258
      %v272 = vunpack.c.h.bf16 %v258
      %v273 = vunpack.c.l.bf16 %v259
      %v274 = vunpack.c.h.bf16 %v259
      %v275 = vunpack.c.l.bf16 %v260
      %v276 = vunpack.c.h.bf16 %v260
      %v277 = vld [vmem:[%s238] sm:$0xff]
      %v278 = vld [vmem:[%s238 + $0x8] sm:$0xff]
      %v279 = vld [vmem:[%s238 + $0x10] sm:$0xff]
      %v280 = vld [vmem:[%s238 + $0x18] sm:$0xff]
      %v281 = vld [vmem:[%s238 + $0x20] sm:$0xff]
      %v282 = vld [vmem:[%s238 + $0x28] sm:$0xff]
      %v283 = vld [vmem:[%s238 + $0x30] sm:$0xff]
      %v284 = vld [vmem:[%s238 + $0x38] sm:$0xff]
      %v285 = vld [vmem:[%s1] ss:$2 sm:$0x3]
      %287 = vset.pattern.permute.xlu0 0
      %288 = vperm.xlu0 %287, %v277
      %v289 = vpop.permute.xlu0 %288
      %292 = vset.pattern.permute.xlu0 0
      %293 = vperm.xlu0 %292, %v278
      %v294 = vpop.permute.xlu0 %293
      %297 = vset.pattern.permute.xlu0 0
      %298 = vperm.xlu0 %297, %v279
      %v299 = vpop.permute.xlu0 %298
      %302 = vset.pattern.permute.xlu0 0
      %303 = vperm.xlu0 %302, %v280
      %v304 = vpop.permute.xlu0 %303
      %307 = vset.pattern.permute.xlu0 0
      %308 = vperm.xlu0 %307, %v281
      %v309 = vpop.permute.xlu0 %308
      %312 = vset.pattern.permute.xlu0 0
      %313 = vperm.xlu0 %312, %v282
      %v314 = vpop.permute.xlu0 %313
      %317 = vset.pattern.permute.xlu0 0
      %318 = vperm.xlu0 %317, %v283
      %v319 = vpop.permute.xlu0 %318
      %322 = vset.pattern.permute.xlu0 0
      %323 = vperm.xlu0 %322, %v284
      %v324 = vpop.permute.xlu0 %323
      %v327 = vperm.slane %v285, 0
      %v328 = vperm.slane %v285, 1
      %v331 = vadd.f32 %v289, %v327
      %v332 = vadd.f32 %v289, %v328
      %v333 = vadd.f32 %v294, %v327
      %v334 = vadd.f32 %v294, %v328
      %v335 = vadd.f32 %v299, %v327
      %v336 = vadd.f32 %v299, %v328
      %v337 = vadd.f32 %v304, %v327
      %v338 = vadd.f32 %v304, %v328
      %v339 = vadd.f32 %v309, %v327
      %v340 = vadd.f32 %v309, %v328
      %v341 = vadd.f32 %v314, %v327
      %v342 = vadd.f32 %v314, %v328
      %v343 = vadd.f32 %v319, %v327
      %v344 = vadd.f32 %v319, %v328
      %v345 = vadd.f32 %v324, %v327
      %v346 = vadd.f32 %v324, %v328
      %v347 = vmul.f32 %v331, 0.2
      %v348 = vmul.f32 %v332, 0.2
      %v349 = vmul.f32 %v333, 0.2
      %v350 = vmul.f32 %v334, 0.2
      %v351 = vmul.f32 %v335, 0.2
      %v352 = vmul.f32 %v336, 0.2
      %v353 = vmul.f32 %v337, 0.2
      %v354 = vmul.f32 %v338, 0.2
      %v355 = vmul.f32 %v339, 0.2
      %v356 = vmul.f32 %v340, 0.2
      %v357 = vmul.f32 %v341, 0.2
      %v358 = vmul.f32 %v342, 0.2
      %v359 = vmul.f32 %v343, 0.2
      %v360 = vmul.f32 %v344, 0.2
      %v361 = vmul.f32 %v345, 0.2
      %v362 = vmul.f32 %v346, 0.2
      %v363 = vmax.f32 %v331, %v347
      %v364 = vmax.f32 %v332, %v348
      %v365 = vmax.f32 %v333, %v349
      %v366 = vmax.f32 %v334, %v350
      %v367 = vmax.f32 %v335, %v351
      %v368 = vmax.f32 %v336, %v352
      %v369 = vmax.f32 %v337, %v353
      %v370 = vmax.f32 %v338, %v354
      %v371 = vmax.f32 %v339, %v355
      %v372 = vmax.f32 %v340, %v356
      %v373 = vmax.f32 %v341, %v357
      %v374 = vmax.f32 %v342, %v358
      %v375 = vmax.f32 %v343, %v359
      %v376 = vmax.f32 %v344, %v360
      %v377 = vmax.f32 %v345, %v361
      %v378 = vmax.f32 %v346, %v362
      %v379 = vadd.f32 %v363, %v261
      %v380 = vadd.f32 %v364, %v262
      %v381 = vadd.f32 %v365, %v263
      %v382 = vadd.f32 %v366, %v264
      %v383 = vadd.f32 %v367, %v265
      %v384 = vadd.f32 %v368, %v266
      %v385 = vadd.f32 %v369, %v267
      %v386 = vadd.f32 %v370, %v268
      %v387 = vadd.f32 %v371, %v269
      %v388 = vadd.f32 %v372, %v270
      %v389 = vadd.f32 %v373, %v271
      %v390 = vadd.f32 %v374, %v272
      %v391 = vadd.f32 %v375, %v273
      %v392 = vadd.f32 %v376, %v274
      %v393 = vadd.f32 %v377, %v275
      %v394 = vadd.f32 %v378, %v276
      %v395 = vmax.f32 %v379, %v380
      %396 = vmax.xlane.f32.xlu0 %v395
      %v397 = vpop.xlane.xlu0 %396
      %v398 = vmax.f32 %v381, %v382
      %399 = vmax.xlane.f32.xlu0 %v398
      %v400 = vpop.xlane.xlu0 %399
      %v401 = vmax.f32 %v383, %v384
      %402 = vmax.xlane.f32.xlu0 %v401
      %v403 = vpop.xlane.xlu0 %402
      %v404 = vmax.f32 %v385, %v386
      %405 = vmax.xlane.f32.xlu0 %v404
      %v406 = vpop.xlane.xlu0 %405
      %v407 = vmax.f32 %v387, %v388
      %408 = vmax.xlane.f32.xlu0 %v407
      %v409 = vpop.xlane.xlu0 %408
      %v410 = vmax.f32 %v389, %v390
      %411 = vmax.xlane.f32.xlu0 %v410
      %v412 = vpop.xlane.xlu0 %411
      %v413 = vmax.f32 %v391, %v392
      %414 = vmax.xlane.f32.xlu0 %v413
      %v415 = vpop.xlane.xlu0 %414
      %v416 = vmax.f32 %v393, %v394
      %417 = vmax.xlane.f32.xlu0 %v416
      %v418 = vpop.xlane.xlu0 %417
      %v419 = vsub.f32 %v379, %v397
      %v420 = vsub.f32 %v380, %v397
      %v421 = vsub.f32 %v381, %v400
      %v422 = vsub.f32 %v382, %v400
      %v423 = vsub.f32 %v383, %v403
      %v424 = vsub.f32 %v384, %v403
      %v425 = vsub.f32 %v385, %v406
      %v426 = vsub.f32 %v386, %v406
      %v427 = vsub.f32 %v387, %v409
      %v428 = vsub.f32 %v388, %v409
      %v429 = vsub.f32 %v389, %v412
      %v430 = vsub.f32 %v390, %v412
      %v431 = vsub.f32 %v391, %v415
      %v432 = vsub.f32 %v392, %v415
      %v433 = vsub.f32 %v393, %v418
      %v434 = vsub.f32 %v394, %v418
      %v435 = vmul.f32 %v419, 1.442695
      %v436 = vpow.pop %v435
      %v437 = vmul.f32 %v420, 1.442695
      %v438 = vpow.pop %v437
      %v439 = vmul.f32 %v421, 1.442695
      %v440 = vpow.pop %v439
      %v441 = vmul.f32 %v422, 1.442695
      %v442 = vpow.pop %v441
      %v443 = vmul.f32 %v423, 1.442695
      %v444 = vpow.pop %v443
      %v445 = vmul.f32 %v424, 1.442695
      %v446 = vpow.pop %v445
      %v447 = vmul.f32 %v425, 1.442695
      %v448 = vpow.pop %v447
      %v449 = vmul.f32 %v426, 1.442695
      %v450 = vpow.pop %v449
      %v451 = vmul.f32 %v427, 1.442695
      %v452 = vpow.pop %v451
      %v453 = vmul.f32 %v428, 1.442695
      %v454 = vpow.pop %v453
      %v455 = vmul.f32 %v429, 1.442695
      %v456 = vpow.pop %v455
      %v457 = vmul.f32 %v430, 1.442695
      %v458 = vpow.pop %v457
      %v459 = vmul.f32 %v431, 1.442695
      %v460 = vpow.pop %v459
      %v461 = vmul.f32 %v432, 1.442695
      %v462 = vpow.pop %v461
      %v463 = vmul.f32 %v433, 1.442695
      %v464 = vpow.pop %v463
      %v465 = vmul.f32 %v434, 1.442695
      %v466 = vpow.pop %v465
      %v467 = vadd.f32 %v436, %v438
      %468 = vadd.xlane.f32.xlu0 %v467
      %v469 = vpop.xlane.xlu0 %468
      %v470 = vadd.f32 %v440, %v442
      %471 = vadd.xlane.f32.xlu0 %v470
      %v472 = vpop.xlane.xlu0 %471
      %v473 = vadd.f32 %v444, %v446
      %474 = vadd.xlane.f32.xlu0 %v473
      %v475 = vpop.xlane.xlu0 %474
      %v476 = vadd.f32 %v448, %v450
      %477 = vadd.xlane.f32.xlu0 %v476
      %v478 = vpop.xlane.xlu0 %477
      %v479 = vadd.f32 %v452, %v454
      %480 = vadd.xlane.f32.xlu0 %v479
      %v481 = vpop.xlane.xlu0 %480
      %v482 = vadd.f32 %v456, %v458
      %483 = vadd.xlane.f32.xlu0 %v482
      %v484 = vpop.xlane.xlu0 %483
      %v485 = vadd.f32 %v460, %v462
      %486 = vadd.xlane.f32.xlu0 %v485
      %v487 = vpop.xlane.xlu0 %486
      %v488 = vadd.f32 %v464, %v466
      %489 = vadd.xlane.f32.xlu0 %v488
      %v490 = vpop.xlane.xlu0 %489
      %v491 = vpack.c.bf16 %v440, %v436
      %v492 = vpack.c.bf16 %v442, %v438
      %v493 = vpack.c.bf16 %v448, %v444
      %v494 = vpack.c.bf16 %v450, %v446
      %v495 = vpack.c.bf16 %v456, %v452
      %v496 = vpack.c.bf16 %v458, %v454
      %v497 = vpack.c.bf16 %v464, %v460
      %v498 = vpack.c.bf16 %v466, %v462
      %v499 = vld [vmem:[%s0] sm:$0xf]
      %v500 = vld [vmem:[%s0 + $0x4] sm:$0xf]
      %v501 = vld [vmem:[%s0 + $0x8] sm:$0xf]
      %v502 = vld [vmem:[%s0 + $0xc] sm:$0xf]
      %v503 = vld [vmem:[%s0 + $0x10] sm:$0xf]
      %v504 = vld [vmem:[%s0 + $0x14] sm:$0xf]
      %v505 = vld [vmem:[%s0 + $0x18] sm:$0xf]
      %v506 = vld [vmem:[%s0 + $0x1c] sm:$0xf]
      %v507 = vld [vmem:[%s0 + $0x20] sm:$0xf]
      %v508 = vld [vmem:[%s0 + $0x24] sm:$0xf]
      %v509 = vld [vmem:[%s0 + $0x28] sm:$0xf]
      %v510 = vld [vmem:[%s0 + $0x2c] sm:$0xf]
      %v511 = vld [vmem:[%s0 + $0x30] sm:$0xf]
      %v512 = vld [vmem:[%s0 + $0x34] sm:$0xf]
      %v513 = vld [vmem:[%s0 + $0x38] sm:$0xf]
      %v514 = vld [vmem:[%s0 + $0x3c] sm:$0xf]
      %v515 = vld [vmem:[%s0 + $0x40] sm:$0xf]
      %v516 = vld [vmem:[%s0 + $0x44] sm:$0xf]
      %v517 = vld [vmem:[%s0 + $0x48] sm:$0xf]
      %v518 = vld [vmem:[%s0 + $0x4c] sm:$0xf]
      %v519 = vld [vmem:[%s0 + $0x50] sm:$0xf]
      %v520 = vld [vmem:[%s0 + $0x54] sm:$0xf]
      %v521 = vld [vmem:[%s0 + $0x58] sm:$0xf]
      %v522 = vld [vmem:[%s0 + $0x5c] sm:$0xf]
      %v523 = vld [vmem:[%s0 + $0x60] sm:$0xf]
      %v524 = vld [vmem:[%s0 + $0x64] sm:$0xf]
      %v525 = vld [vmem:[%s0 + $0x68] sm:$0xf]
      %v526 = vld [vmem:[%s0 + $0x6c] sm:$0xf]
      %v527 = vld [vmem:[%s0 + $0x70] sm:$0xf]
      %v528 = vld [vmem:[%s0 + $0x74] sm:$0xf]
      %v529 = vld [vmem:[%s0 + $0x78] sm:$0xf]
      %v530 = vld [vmem:[%s0 + $0x7c] sm:$0xf]
      %v563 = vunpack.c.l.b16 %v499
      %v564 = vunpack.c.l.b16 %v500
      %v565 = vunpack.c.l.b16 %v501
      %v566 = vunpack.c.l.b16 %v502
      %v567 = vunpack.c.l.b16 %v503
      %v568 = vunpack.c.l.b16 %v504
      %v569 = vunpack.c.l.b16 %v505
      %v570 = vunpack.c.l.b16 %v506
      %v571 = vunpack.c.l.b16 %v507
      %v572 = vunpack.c.l.b16 %v508
      %v573 = vunpack.c.l.b16 %v509
      %v574 = vunpack.c.l.b16 %v510
      %v575 = vunpack.c.l.b16 %v511
      %v576 = vunpack.c.l.b16 %v512
      %v577 = vunpack.c.l.b16 %v513
      %v578 = vunpack.c.l.b16 %v514
      %v579 = vunpack.c.l.b16 %v515
      %v580 = vunpack.c.l.b16 %v516
      %v581 = vunpack.c.l.b16 %v517
      %v582 = vunpack.c.l.b16 %v518
      %v583 = vunpack.c.l.b16 %v519
      %v584 = vunpack.c.l.b16 %v520
      %v585 = vunpack.c.l.b16 %v521
      %v586 = vunpack.c.l.b16 %v522
      %v587 = vunpack.c.l.b16 %v523
      %v588 = vunpack.c.l.b16 %v524
      %v589 = vunpack.c.l.b16 %v525
      %v590 = vunpack.c.l.b16 %v526
      %v591 = vunpack.c.l.b16 %v527
      %v592 = vunpack.c.l.b16 %v528
      %v593 = vunpack.c.l.b16 %v529
      %v594 = vunpack.c.l.b16 %v530
      %v595 = vpack.c.b16 %v564, %v563
      %v596 = vpack.c.b16 %v566, %v565
      %v597 = vpack.c.b16 %v568, %v567
      %v598 = vpack.c.b16 %v570, %v569
      %v599 = vpack.c.b16 %v572, %v571
      %v600 = vpack.c.b16 %v574, %v573
      %v601 = vpack.c.b16 %v576, %v575
      %v602 = vpack.c.b16 %v578, %v577
      %v603 = vpack.c.b16 %v580, %v579
      %v604 = vpack.c.b16 %v582, %v581
      %v605 = vpack.c.b16 %v584, %v583
      %v606 = vpack.c.b16 %v586, %v585
      %v607 = vpack.c.b16 %v588, %v587
      %v608 = vpack.c.b16 %v590, %v589
      %v609 = vpack.c.b16 %v592, %v591
      %v610 = vpack.c.b16 %v594, %v593
      %627 = vmatpush.bf16.msra.mxu0 %v602
      %628 = vmatpush.bf16.msra.mxu0 %v601
      %629 = vmatpush.bf16.msra.mxu0 %v600
      %630 = vmatpush.bf16.msra.mxu0 %v599
      %631 = vmatpush.bf16.msra.mxu0 %v598
      %632 = vmatpush.bf16.msra.mxu0 %v597
      %633 = vmatpush.bf16.msra.mxu0 %v596
      %634 = vmatpush.bf16.msra.mxu0 %v595
      %635 = vmatmul.bf16.gmra.mxu0 %v491
      %v636 = vpop.f32.mrf.mxu0
      %v637 = vadd.f32 0.0, %v636
      %v638 = vpop.f32.mrf.mxu0
      %v639 = vadd.f32 0.0, %v638
      %640 = vmatmul.bf16.gmra.mxu0 %v493
      %v641 = vpop.f32.mrf.mxu0
      %v642 = vadd.f32 0.0, %v641
      %v643 = vpop.f32.mrf.mxu0
      %v644 = vadd.f32 0.0, %v643
      %645 = vmatmul.bf16.gmra.mxu0 %v495
      %v646 = vpop.f32.mrf.mxu0
      %v647 = vadd.f32 0.0, %v646
      %v648 = vpop.f32.mrf.mxu0
      %v649 = vadd.f32 0.0, %v648
      %650 = vmatmul.bf16.gmra.mxu0 %v497
      %v651 = vpop.f32.mrf.mxu0
      %v652 = vadd.f32 0.0, %v651
      %v653 = vpop.f32.mrf.mxu0
      %v654 = vadd.f32 0.0, %v653
      %655 = vdwg.mxu0
      %656 = vmatpush.bf16.msra.mxu0 %v610
      %657 = vmatpush.bf16.msra.mxu0 %v609
      %658 = vmatpush.bf16.msra.mxu0 %v608
      %659 = vmatpush.bf16.msra.mxu0 %v607
      %660 = vmatpush.bf16.msra.mxu0 %v606
      %661 = vmatpush.bf16.msra.mxu0 %v605
      %662 = vmatpush.bf16.msra.mxu0 %v604
      %663 = vmatpush.bf16.msra.mxu0 %v603
      %664 = vmatmul.bf16.gmra.mxu0 %v492
      %v665 = vpop.f32.mrf.mxu0
      %v666 = vadd.f32 %v637, %v665
      %v667 = vpop.f32.mrf.mxu0
      %v668 = vadd.f32 %v639, %v667
      %669 = vmatmul.bf16.gmra.mxu0 %v494
      %v670 = vpop.f32.mrf.mxu0
      %v671 = vadd.f32 %v642, %v670
      %v672 = vpop.f32.mrf.mxu0
      %v673 = vadd.f32 %v644, %v672
      %674 = vmatmul.bf16.gmra.mxu0 %v496
      %v675 = vpop.f32.mrf.mxu0
      %v676 = vadd.f32 %v647, %v675
      %v677 = vpop.f32.mrf.mxu0
      %v678 = vadd.f32 %v649, %v677
      %679 = vmatmul.bf16.gmra.mxu0 %v498
      %v680 = vpop.f32.mrf.mxu0
      %v681 = vadd.f32 %v652, %v680
      %v682 = vpop.f32.mrf.mxu0
      %v683 = vadd.f32 %v654, %v682
      %684 = vdwg.mxu0
      %v685 = vrcp.pop %v469
      %v686 = vrcp.pop %v472
      %v687 = vrcp.pop %v475
      %v688 = vrcp.pop %v478
      %v689 = vrcp.pop %v481
      %v690 = vrcp.pop %v484
      %v691 = vrcp.pop %v487
      %v692 = vrcp.pop %v490
      %v693 = vmul.f32 %v666, %v685
      %v694 = vmul.f32 %v668, %v686
      %v695 = vmul.f32 %v671, %v687
      %v696 = vmul.f32 %v673, %v688
      %v697 = vmul.f32 %v676, %v689
      %v698 = vmul.f32 %v678, %v690
      %v699 = vmul.f32 %v681, %v691
      %v700 = vmul.f32 %v683, %v692
      %v701 = vld [vmem:[%s2] sm:$0x1]
      %v703 = vperm.slane %v701, 0
      %v705 = vadd.f32 %v693, %v703
      %v706 = vadd.f32 %v694, %v703
      %v707 = vadd.f32 %v695, %v703
      %v708 = vadd.f32 %v696, %v703
      %v709 = vadd.f32 %v697, %v703
      %v710 = vadd.f32 %v698, %v703
      %v711 = vadd.f32 %v699, %v703
      %v712 = vadd.f32 %v700, %v703
      %s713 = scalar_lea.vmem %s1, 1
      %v714 = vld [vmem:[%s713] ss:$2 sm:$0x3]
      %715 = vset.pattern.permute.xlu0 1
      %716 = vperm.xlu0 %715, %v277
      %v717 = vpop.permute.xlu0 %716
      %719 = vset.pattern.permute.xlu0 1
      %720 = vperm.xlu0 %719, %v278
      %v721 = vpop.permute.xlu0 %720
      %723 = vset.pattern.permute.xlu0 1
      %724 = vperm.xlu0 %723, %v279
      %v725 = vpop.permute.xlu0 %724
      %727 = vset.pattern.permute.xlu0 1
      %728 = vperm.xlu0 %727, %v280
      %v729 = vpop.permute.xlu0 %728
      %731 = vset.pattern.permute.xlu0 1
      %732 = vperm.xlu0 %731, %v281
      %v733 = vpop.permute.xlu0 %732
      %735 = vset.pattern.permute.xlu0 1
      %736 = vperm.xlu0 %735, %v282
      %v737 = vpop.permute.xlu0 %736
      %739 = vset.pattern.permute.xlu0 1
      %740 = vperm.xlu0 %739, %v283
      %v741 = vpop.permute.xlu0 %740
      %743 = vset.pattern.permute.xlu0 1
      %744 = vperm.xlu0 %743, %v284
      %v745 = vpop.permute.xlu0 %744
      %v748 = vperm.slane %v714, 0
      %v749 = vperm.slane %v714, 1
      %v752 = vadd.f32 %v717, %v748
      %v753 = vadd.f32 %v717, %v749
      %v754 = vadd.f32 %v721, %v748
      %v755 = vadd.f32 %v721, %v749
      %v756 = vadd.f32 %v725, %v748
      %v757 = vadd.f32 %v725, %v749
      %v758 = vadd.f32 %v729, %v748
      %v759 = vadd.f32 %v729, %v749
      %v760 = vadd.f32 %v733, %v748
      %v761 = vadd.f32 %v733, %v749
      %v762 = vadd.f32 %v737, %v748
      %v763 = vadd.f32 %v737, %v749
      %v764 = vadd.f32 %v741, %v748
      %v765 = vadd.f32 %v741, %v749
      %v766 = vadd.f32 %v745, %v748
      %v767 = vadd.f32 %v745, %v749
      %v768 = vmul.f32 %v752, 0.2
      %v769 = vmul.f32 %v753, 0.2
      %v770 = vmul.f32 %v754, 0.2
      %v771 = vmul.f32 %v755, 0.2
      %v772 = vmul.f32 %v756, 0.2
      %v773 = vmul.f32 %v757, 0.2
      %v774 = vmul.f32 %v758, 0.2
      %v775 = vmul.f32 %v759, 0.2
      %v776 = vmul.f32 %v760, 0.2
      %v777 = vmul.f32 %v761, 0.2
      %v778 = vmul.f32 %v762, 0.2
      %v779 = vmul.f32 %v763, 0.2
      %v780 = vmul.f32 %v764, 0.2
      %v781 = vmul.f32 %v765, 0.2
      %v782 = vmul.f32 %v766, 0.2
      %v783 = vmul.f32 %v767, 0.2
      %v784 = vmax.f32 %v752, %v768
      %v785 = vmax.f32 %v753, %v769
      %v786 = vmax.f32 %v754, %v770
      %v787 = vmax.f32 %v755, %v771
      %v788 = vmax.f32 %v756, %v772
      %v789 = vmax.f32 %v757, %v773
      %v790 = vmax.f32 %v758, %v774
      %v791 = vmax.f32 %v759, %v775
      %v792 = vmax.f32 %v760, %v776
      %v793 = vmax.f32 %v761, %v777
      %v794 = vmax.f32 %v762, %v778
      %v795 = vmax.f32 %v763, %v779
      %v796 = vmax.f32 %v764, %v780
      %v797 = vmax.f32 %v765, %v781
      %v798 = vmax.f32 %v766, %v782
      %v799 = vmax.f32 %v767, %v783
      %v800 = vadd.f32 %v784, %v261
      %v801 = vadd.f32 %v785, %v262
      %v802 = vadd.f32 %v786, %v263
      %v803 = vadd.f32 %v787, %v264
      %v804 = vadd.f32 %v788, %v265
      %v805 = vadd.f32 %v789, %v266
      %v806 = vadd.f32 %v790, %v267
      %v807 = vadd.f32 %v791, %v268
      %v808 = vadd.f32 %v792, %v269
      %v809 = vadd.f32 %v793, %v270
      %v810 = vadd.f32 %v794, %v271
      %v811 = vadd.f32 %v795, %v272
      %v812 = vadd.f32 %v796, %v273
      %v813 = vadd.f32 %v797, %v274
      %v814 = vadd.f32 %v798, %v275
      %v815 = vadd.f32 %v799, %v276
      %v816 = vmax.f32 %v800, %v801
      %817 = vmax.xlane.f32.xlu0 %v816
      %v818 = vpop.xlane.xlu0 %817
      %v819 = vmax.f32 %v802, %v803
      %820 = vmax.xlane.f32.xlu0 %v819
      %v821 = vpop.xlane.xlu0 %820
      %v822 = vmax.f32 %v804, %v805
      %823 = vmax.xlane.f32.xlu0 %v822
      %v824 = vpop.xlane.xlu0 %823
      %v825 = vmax.f32 %v806, %v807
      %826 = vmax.xlane.f32.xlu0 %v825
      %v827 = vpop.xlane.xlu0 %826
      %v828 = vmax.f32 %v808, %v809
      %829 = vmax.xlane.f32.xlu0 %v828
      %v830 = vpop.xlane.xlu0 %829
      %v831 = vmax.f32 %v810, %v811
      %832 = vmax.xlane.f32.xlu0 %v831
      %v833 = vpop.xlane.xlu0 %832
      %v834 = vmax.f32 %v812, %v813
      %835 = vmax.xlane.f32.xlu0 %v834
      %v836 = vpop.xlane.xlu0 %835
      %v837 = vmax.f32 %v814, %v815
      %838 = vmax.xlane.f32.xlu0 %v837
      %v839 = vpop.xlane.xlu0 %838
      %v840 = vsub.f32 %v800, %v818
      %v841 = vsub.f32 %v801, %v818
      %v842 = vsub.f32 %v802, %v821
      %v843 = vsub.f32 %v803, %v821
      %v844 = vsub.f32 %v804, %v824
      %v845 = vsub.f32 %v805, %v824
      %v846 = vsub.f32 %v806, %v827
      %v847 = vsub.f32 %v807, %v827
      %v848 = vsub.f32 %v808, %v830
      %v849 = vsub.f32 %v809, %v830
      %v850 = vsub.f32 %v810, %v833
      %v851 = vsub.f32 %v811, %v833
      %v852 = vsub.f32 %v812, %v836
      %v853 = vsub.f32 %v813, %v836
      %v854 = vsub.f32 %v814, %v839
      %v855 = vsub.f32 %v815, %v839
      %v856 = vmul.f32 %v840, 1.442695
      %v857 = vpow.pop %v856
      %v858 = vmul.f32 %v841, 1.442695
      %v859 = vpow.pop %v858
      %v860 = vmul.f32 %v842, 1.442695
      %v861 = vpow.pop %v860
      %v862 = vmul.f32 %v843, 1.442695
      %v863 = vpow.pop %v862
      %v864 = vmul.f32 %v844, 1.442695
      %v865 = vpow.pop %v864
      %v866 = vmul.f32 %v845, 1.442695
      %v867 = vpow.pop %v866
      %v868 = vmul.f32 %v846, 1.442695
      %v869 = vpow.pop %v868
      %v870 = vmul.f32 %v847, 1.442695
      %v871 = vpow.pop %v870
      %v872 = vmul.f32 %v848, 1.442695
      %v873 = vpow.pop %v872
      %v874 = vmul.f32 %v849, 1.442695
      %v875 = vpow.pop %v874
      %v876 = vmul.f32 %v850, 1.442695
      %v877 = vpow.pop %v876
      %v878 = vmul.f32 %v851, 1.442695
      %v879 = vpow.pop %v878
      %v880 = vmul.f32 %v852, 1.442695
      %v881 = vpow.pop %v880
      %v882 = vmul.f32 %v853, 1.442695
      %v883 = vpow.pop %v882
      %v884 = vmul.f32 %v854, 1.442695
      %v885 = vpow.pop %v884
      %v886 = vmul.f32 %v855, 1.442695
      %v887 = vpow.pop %v886
      %v888 = vadd.f32 %v857, %v859
      %889 = vadd.xlane.f32.xlu0 %v888
      %v890 = vpop.xlane.xlu0 %889
      %v891 = vadd.f32 %v861, %v863
      %892 = vadd.xlane.f32.xlu0 %v891
      %v893 = vpop.xlane.xlu0 %892
      %v894 = vadd.f32 %v865, %v867
      %895 = vadd.xlane.f32.xlu0 %v894
      %v896 = vpop.xlane.xlu0 %895
      %v897 = vadd.f32 %v869, %v871
      %898 = vadd.xlane.f32.xlu0 %v897
      %v899 = vpop.xlane.xlu0 %898
      %v900 = vadd.f32 %v873, %v875
      %901 = vadd.xlane.f32.xlu0 %v900
      %v902 = vpop.xlane.xlu0 %901
      %v903 = vadd.f32 %v877, %v879
      %904 = vadd.xlane.f32.xlu0 %v903
      %v905 = vpop.xlane.xlu0 %904
      %v906 = vadd.f32 %v881, %v883
      %907 = vadd.xlane.f32.xlu0 %v906
      %v908 = vpop.xlane.xlu0 %907
      %v909 = vadd.f32 %v885, %v887
      %910 = vadd.xlane.f32.xlu0 %v909
      %v911 = vpop.xlane.xlu0 %910
      %v912 = vpack.c.bf16 %v861, %v857
      %v913 = vpack.c.bf16 %v863, %v859
      %v914 = vpack.c.bf16 %v869, %v865
      %v915 = vpack.c.bf16 %v871, %v867
      %v916 = vpack.c.bf16 %v877, %v873
      %v917 = vpack.c.bf16 %v879, %v875
      %v918 = vpack.c.bf16 %v885, %v881
      %v919 = vpack.c.bf16 %v887, %v883
      %920 = vrot.lane.b32.xlu0 %v595, 120
      %v921 = vpop.permute.xlu0 %920
      %922 = vrot.lane.b32.xlu0 %v596, 120
      %v923 = vpop.permute.xlu0 %922
      %924 = vrot.lane.b32.xlu0 %v597, 120
      %v925 = vpop.permute.xlu0 %924
      %926 = vrot.lane.b32.xlu0 %v598, 120
      %v927 = vpop.permute.xlu0 %926
      %928 = vrot.lane.b32.xlu0 %v599, 120
      %v929 = vpop.permute.xlu0 %928
      %930 = vrot.lane.b32.xlu0 %v600, 120
      %v931 = vpop.permute.xlu0 %930
      %932 = vrot.lane.b32.xlu0 %v601, 120
      %v933 = vpop.permute.xlu0 %932
      %934 = vrot.lane.b32.xlu0 %v602, 120
      %v935 = vpop.permute.xlu0 %934
      %936 = vrot.lane.b32.xlu0 %v603, 120
      %v937 = vpop.permute.xlu0 %936
      %938 = vrot.lane.b32.xlu0 %v604, 120
      %v939 = vpop.permute.xlu0 %938
      %940 = vrot.lane.b32.xlu0 %v605, 120
      %v941 = vpop.permute.xlu0 %940
      %942 = vrot.lane.b32.xlu0 %v606, 120
      %v943 = vpop.permute.xlu0 %942
      %944 = vrot.lane.b32.xlu0 %v607, 120
      %v945 = vpop.permute.xlu0 %944
      %946 = vrot.lane.b32.xlu0 %v608, 120
      %v947 = vpop.permute.xlu0 %946
      %948 = vrot.lane.b32.xlu0 %v609, 120
      %v949 = vpop.permute.xlu0 %948
      %950 = vrot.lane.b32.xlu0 %v610, 120
      %v951 = vpop.permute.xlu0 %950
      %968 = vmatpush.bf16.msra.mxu0 %v935
      %969 = vmatpush.bf16.msra.mxu0 %v933
      %970 = vmatpush.bf16.msra.mxu0 %v931
      %971 = vmatpush.bf16.msra.mxu0 %v929
      %972 = vmatpush.bf16.msra.mxu0 %v927
      %973 = vmatpush.bf16.msra.mxu0 %v925
      %974 = vmatpush.bf16.msra.mxu0 %v923
      %975 = vmatpush.bf16.msra.mxu0 %v921
      %976 = vmatmul.bf16.gmra.mxu0 %v912
      %v977 = vpop.f32.mrf.mxu0
      %v978 = vadd.f32 0.0, %v977
      %v979 = vpop.f32.mrf.mxu0
      %v980 = vadd.f32 0.0, %v979
      %981 = vmatmul.bf16.gmra.mxu0 %v914
      %v982 = vpop.f32.mrf.mxu0
      %v983 = vadd.f32 0.0, %v982
      %v984 = vpop.f32.mrf.mxu0
      %v985 = vadd.f32 0.0, %v984
      %986 = vmatmul.bf16.gmra.mxu0 %v916
      %v987 = vpop.f32.mrf.mxu0
      %v988 = vadd.f32 0.0, %v987
      %v989 = vpop.f32.mrf.mxu0
      %v990 = vadd.f32 0.0, %v989
      %991 = vmatmul.bf16.gmra.mxu0 %v918
      %v992 = vpop.f32.mrf.mxu0
      %v993 = vadd.f32 0.0, %v992
      %v994 = vpop.f32.mrf.mxu0
      %v995 = vadd.f32 0.0, %v994
      %996 = vdwg.mxu0
      %997 = vmatpush.bf16.msra.mxu0 %v951
      %998 = vmatpush.bf16.msra.mxu0 %v949
      %999 = vmatpush.bf16.msra.mxu0 %v947
      %1000 = vmatpush.bf16.msra.mxu0 %v945
      %1001 = vmatpush.bf16.msra.mxu0 %v943
      %1002 = vmatpush.bf16.msra.mxu0 %v941
      %1003 = vmatpush.bf16.msra.mxu0 %v939
      %1004 = vmatpush.bf16.msra.mxu0 %v937
      %1005 = vmatmul.bf16.gmra.mxu0 %v913
      %v1006 = vpop.f32.mrf.mxu0
      %v1007 = vadd.f32 %v978, %v1006
      %v1008 = vpop.f32.mrf.mxu0
      %v1009 = vadd.f32 %v980, %v1008
      %1010 = vmatmul.bf16.gmra.mxu0 %v915
      %v1011 = vpop.f32.mrf.mxu0
      %v1012 = vadd.f32 %v983, %v1011
      %v1013 = vpop.f32.mrf.mxu0
      %v1014 = vadd.f32 %v985, %v1013
      %1015 = vmatmul.bf16.gmra.mxu0 %v917
      %v1016 = vpop.f32.mrf.mxu0
      %v1017 = vadd.f32 %v988, %v1016
      %v1018 = vpop.f32.mrf.mxu0
      %v1019 = vadd.f32 %v990, %v1018
      %1020 = vmatmul.bf16.gmra.mxu0 %v919
      %v1021 = vpop.f32.mrf.mxu0
      %v1022 = vadd.f32 %v993, %v1021
      %v1023 = vpop.f32.mrf.mxu0
      %v1024 = vadd.f32 %v995, %v1023
      %1025 = vdwg.mxu0
      %v1026 = vrcp.pop %v890
      %v1027 = vrcp.pop %v893
      %v1028 = vrcp.pop %v896
      %v1029 = vrcp.pop %v899
      %v1030 = vrcp.pop %v902
      %v1031 = vrcp.pop %v905
      %v1032 = vrcp.pop %v908
      %v1033 = vrcp.pop %v911
      %v1034 = vmul.f32 %v1007, %v1026
      %v1035 = vmul.f32 %v1009, %v1027
      %v1036 = vmul.f32 %v1012, %v1028
      %v1037 = vmul.f32 %v1014, %v1029
      %v1038 = vmul.f32 %v1017, %v1030
      %v1039 = vmul.f32 %v1019, %v1031
      %v1040 = vmul.f32 %v1022, %v1032
      %v1041 = vmul.f32 %v1024, %v1033
      %1042 = vrot.lane.b32.xlu0 %v703, 120
      %v1043 = vpop.permute.xlu0 %1042
      %v1045 = vadd.f32 %v1034, %v1043
      %v1046 = vadd.f32 %v1035, %v1043
      %v1047 = vadd.f32 %v1036, %v1043
      %v1048 = vadd.f32 %v1037, %v1043
      %v1049 = vadd.f32 %v1038, %v1043
      %v1050 = vadd.f32 %v1039, %v1043
      %v1051 = vadd.f32 %v1040, %v1043
      %v1052 = vadd.f32 %v1041, %v1043
      %1061 = vrot.lane.b32.xlu0 %v1045, 8
      %v1062 = vpop.permute.xlu0 %1061
      %1063 = vrot.lane.b32.xlu0 %v1046, 8
      %v1064 = vpop.permute.xlu0 %1063
      %1065 = vrot.lane.b32.xlu0 %v1047, 8
      %v1066 = vpop.permute.xlu0 %1065
      %1067 = vrot.lane.b32.xlu0 %v1048, 8
      %v1068 = vpop.permute.xlu0 %1067
      %1069 = vrot.lane.b32.xlu0 %v1049, 8
      %v1070 = vpop.permute.xlu0 %1069
      %1071 = vrot.lane.b32.xlu0 %v1050, 8
      %v1072 = vpop.permute.xlu0 %1071
      %1073 = vrot.lane.b32.xlu0 %v1051, 8
      %v1074 = vpop.permute.xlu0 %1073
      %1075 = vrot.lane.b32.xlu0 %v1052, 8
      %v1076 = vpop.permute.xlu0 %1075
      %vm1085 = vcmask 64512
      %v1086 = vsel %vm1085, %v705, %v1062
      %v1087 = vsel %vm1085, %v706, %v1064
      %v1088 = vsel %vm1085, %v707, %v1066
      %v1089 = vsel %vm1085, %v708, %v1068
      %v1090 = vsel %vm1085, %v709, %v1070
      %v1091 = vsel %vm1085, %v710, %v1072
      %v1092 = vsel %vm1085, %v711, %v1074
      %v1093 = vsel %vm1085, %v712, %v1076
      %v1094 = vmax.f32 %v1086, 0.0
      %v1095 = vmax.f32 %v1087, 0.0
      %v1096 = vmax.f32 %v1088, 0.0
      %v1097 = vmax.f32 %v1089, 0.0
      %v1098 = vmax.f32 %v1090, 0.0
      %v1099 = vmax.f32 %v1091, 0.0
      %v1100 = vmax.f32 %v1092, 0.0
      %v1101 = vmax.f32 %v1093, 0.0
      %vm1102 = vcmask 130048
      %1103 = vst.msk [vmem:[%s251] sm:$0xff] %vm1102, %v1094
      %1104 = vst.msk [vmem:[%s251 + $0x8] sm:$0xff] %vm1102, %v1095
      %1105 = vst.msk [vmem:[%s251 + $0x10] sm:$0xff] %vm1102, %v1096
      %1106 = vst.msk [vmem:[%s251 + $0x18] sm:$0xff] %vm1102, %v1097
      %1107 = vst.msk [vmem:[%s251 + $0x20] sm:$0xff] %vm1102, %v1098
      %1108 = vst.msk [vmem:[%s251 + $0x28] sm:$0xff] %vm1102, %v1099
      %1109 = vst.msk [vmem:[%s251 + $0x30] sm:$0xff] %vm1102, %v1100
      %1110 = vst.msk [vmem:[%s251 + $0x38] sm:$0xff] %vm1102, %v1101
      %s1111 = smul.u32 8, %s16
      %p1112 = scmp.lt.s32.totalorder %s1111, 31
      %s1113 = scalar_select %p1112, %s1111, 31
      %s1114 = smul.addr %s1113, 8
      %s1115 = scalar_lea.vmem %s5, %s1114
      // Predicated region
      $region41: #{resgat_forward.5} parent=39 // pred_check
        %p1116 = pneg %p149
      $region42: #{resgat_forward.5} parent=39 // pred_check_branch
        %1118 = sbr.rel (%p1116) target = $region44
      $region43: #{resgat_forward.5} parent=39 // pred_region
        %s1119 = smul.u32 8, %s16
      $region44: #{resgat_forward.5} parent=39 // pred_fallthru
        _
    $region40: #{resgat_forward.5} parent=5 // pred_fallthru
      _
    %p1120 = scmp.le.s32.totalorder 2, %s11
    // Predicated region
    $region45: #{resgat_forward.5} parent=5 // pred_check
      %p1121 = pneg %p1120
    $region46: #{resgat_forward.5} parent=5 // pred_check_branch
      %1123 = sbr.rel (%p1121) target = $region48
    $region47: #{resgat_forward.5} parent=5 // pred_region
      %s1124 = ssub.s32 %s11, 2
      // Predicated region
      $region49: #{resgat_forward.5} parent=47 // pred_check
        %p1125 = pneg %p155
      $region50: #{resgat_forward.5} parent=47 // pred_check_branch
        %1127 = sbr.rel (%p1125) target = $region52
      $region51: #{resgat_forward.5} parent=47 // pred_region
        %s1128 = smul.u32 8, %s17
        %p1129 = scmp.lt.s32.totalorder %s1128, 31
        %s1130 = scalar_select %p1129, %s1128, 31
        %s1131 = smul.addr %s1130, 8
        %s1132 = scalar_lea.vmem %s5, %s1131
      $region52: #{resgat_forward.5} parent=47 // pred_fallthru
        _
    $region48: #{resgat_forward.5} parent=5 // pred_fallthru
      _
  $region6: #{resgat_forward.5} parent=0 // loop_footer
    %s15 = sadd.s32 1, %s11
  $region7: #{resgat_forward.5} parent=0 // loop_footer_branch
    %10 = sbr.rel target = $region3
  $region8: #{resgat_forward.5} parent=0 // loop_exit
    _

// kernel: resgat_forward.9
$region0: #{resgat_forward.9}
  #allocation0 [shape = 'u32[]', space=smem, size = 0x4, offset = 0x4, fixed_abs, tag = 'smem constant byte address 0x4 - core index']
  #allocation1 [shape = 'u32[72,128]{1,0:T(1,128)}', space=vmem, size = 0x9000, scoped, tag = 'internal scratch']
  %s0 = inlined_call_operand.vmem [shape: bf16[256,16], index: 0, kind: input, shape index: {}]
  %s1 = inlined_call_operand.vmem [shape: f32[2,256], index: 1, kind: input, shape index: {}]
  %s2 = inlined_call_operand.vmem [shape: f32[1,16], index: 2, kind: input, shape index: {}]
  %s3 = inlined_call_operand.vmem [shape: f32[256,2], index: 3, kind: input, shape index: {}]
  %s4 = inlined_call_operand.vmem [shape: bf16[256,256], index: 4, kind: input, shape index: {}]
  %s5 = inlined_call_operand.vmem [shape: f32[256,16], index: 5, kind: output, shape index: {}]
  %s6 = sld [smem:[#allocation0]]
  $region53: #{resgat_forward.9} parent=0
    _
  %s8 = ssub.s32 1, %s6
  %s9 = scalar_select 0, %s8, %s6
  loop: start=0, step=1, limit=6
  $region2: #{resgat_forward.9} parent=0 // loop_pre_header
    _
  $region3: #{resgat_forward.9} parent=0 // loop_header
    %s11 = sphi 0, %s15
    %p12 = scmp.ge.s32.totalorder %s11, 6
    %s19 = sphi 0, %s19
    %s21 = sphi 0, %s19
    %s22 = sphi 0, %s21
    %s36 = sphi 0, %s22
    %s40 = sphi 0, %s40
    %s42 = sphi 0, %s40
    %s43 = sphi 0, %s42
    %s57 = sphi 0, %s43
    %s61 = sphi 0, %s61
    %s63 = sphi 0, %s61
    %s64 = sphi 0, %s63
    %s78 = sphi 0, %s64
    %s84 = sphi 0, %s86
    %s87 = sphi 0, %s84
    %s88 = sphi 0, %s87
    %s104 = sphi 0, %s88
    %s110 = sphi 0, %s112
    %s113 = sphi 0, %s110
    %s114 = sphi 0, %s113
    %s130 = sphi 0, %s114
    %s136 = sphi 0, %s138
    %s139 = sphi 0, %s136
    %s140 = sphi 0, %s139
    %s156 = sphi 0, %s140
  $region4: #{resgat_forward.9} parent=0 // loop_header_branch
    %14 = sbr.rel (%p12) target = $region8
  $region5: #{resgat_forward.9} parent=0 // loop_body
    %s16 = ssub.s32 %s11, 1
    %s17 = ssub.s32 %s11, 2
    %s18 = sadd.s32 %s11, 1
    %s20 = sadd.s32 %s19, 1
    %p23 = scmp.eq.s32.totalorder %s11, 3
    %p24 = scmp.ne.s32.totalorder %s19, %s21
    %p25 = scmp.eq.s32.totalorder %s11, 0
    %p26 = por %p24, %p25
    %p27 = scmp.ne.s32.totalorder %s19, %s21
    %p28 = scmp.eq.s32.totalorder %s16, 3
    %p29 = por %p27, %p28
    %p30 = scmp.ne.s32.totalorder %s21, %s22
    %p31 = scmp.eq.s32.totalorder %s16, 0
    %p32 = por %p30, %p31
    %p33 = scmp.ne.s32.totalorder %s21, %s22
    %p34 = scmp.eq.s32.totalorder %s17, 3
    %p35 = por %p33, %p34
    %p37 = scmp.ne.s32.totalorder %s22, %s36
    %p38 = scmp.eq.s32.totalorder %s17, 0
    %p39 = por %p37, %p38
    %s41 = sadd.s32 %s40, 1
    %p44 = scmp.eq.s32.totalorder %s11, 3
    %p45 = scmp.ne.s32.totalorder %s40, %s42
    %p46 = scmp.eq.s32.totalorder %s11, 0
    %p47 = por %p45, %p46
    %p48 = scmp.ne.s32.totalorder %s40, %s42
    %p49 = scmp.eq.s32.totalorder %s16, 3
    %p50 = por %p48, %p49
    %p51 = scmp.ne.s32.totalorder %s42, %s43
    %p52 = scmp.eq.s32.totalorder %s16, 0
    %p53 = por %p51, %p52
    %p54 = scmp.ne.s32.totalorder %s42, %s43
    %p55 = scmp.eq.s32.totalorder %s17, 3
    %p56 = por %p54, %p55
    %p58 = scmp.ne.s32.totalorder %s43, %s57
    %p59 = scmp.eq.s32.totalorder %s17, 0
    %p60 = por %p58, %p59
    %s62 = sadd.s32 %s61, 1
    %p65 = scmp.eq.s32.totalorder %s11, 3
    %p66 = scmp.ne.s32.totalorder %s61, %s63
    %p67 = scmp.eq.s32.totalorder %s11, 0
    %p68 = por %p66, %p67
    %p69 = scmp.ne.s32.totalorder %s61, %s63
    %p70 = scmp.eq.s32.totalorder %s16, 3
    %p71 = por %p69, %p70
    %p72 = scmp.ne.s32.totalorder %s63, %s64
    %p73 = scmp.eq.s32.totalorder %s16, 0
    %p74 = por %p72, %p73
    %p75 = scmp.ne.s32.totalorder %s63, %s64
    %p76 = scmp.eq.s32.totalorder %s17, 3
    %p77 = por %p75, %p76
    %p79 = scmp.ne.s32.totalorder %s64, %s78
    %p80 = scmp.eq.s32.totalorder %s17, 0
    %p81 = por %p79, %p80
    %s82 = ssub.s32 %s11, %s18
    %p83 = scmp.eq.s32.totalorder %s82, 0
    %s85 = sadd.s32 %s84, 1
    %s86 = scalar_select %p83, %s84, %s85
    %p89 = pneg %p83
    %p90 = scmp.eq.s32.totalorder %s11, 3
    %p91 = por %p89, %p90
    %p92 = scmp.ne.s32.totalorder %s84, %s87
    %p93 = scmp.eq.s32.totalorder %s11, 0
    %p94 = por %p92, %p93
    %p95 = scmp.ne.s32.totalorder %s84, %s87
    %p96 = scmp.eq.s32.totalorder %s16, 3
    %p97 = por %p95, %p96
    %p98 = scmp.ne.s32.totalorder %s87, %s88
    %p99 = scmp.eq.s32.totalorder %s16, 0
    %p100 = por %p98, %p99
    %p101 = scmp.ne.s32.totalorder %s87, %s88
    %p102 = scmp.eq.s32.totalorder %s17, 3
    %p103 = por %p101, %p102
    %p105 = scmp.ne.s32.totalorder %s88, %s104
    %p106 = scmp.eq.s32.totalorder %s17, 0
    %p107 = por %p105, %p106
    %s108 = ssub.s32 %s11, %s18
    %p109 = scmp.eq.s32.totalorder %s108, 0
    %s111 = sadd.s32 %s110, 1
    %s112 = scalar_select %p109, %s110, %s111
    %p115 = pneg %p109
    %p116 = scmp.eq.s32.totalorder %s11, 3
    %p117 = por %p115, %p116
    %p118 = scmp.ne.s32.totalorder %s110, %s113
    %p119 = scmp.eq.s32.totalorder %s11, 0
    %p120 = por %p118, %p119
    %p121 = scmp.ne.s32.totalorder %s110, %s113
    %p122 = scmp.eq.s32.totalorder %s16, 3
    %p123 = por %p121, %p122
    %p124 = scmp.ne.s32.totalorder %s113, %s114
    %p125 = scmp.eq.s32.totalorder %s16, 0
    %p126 = por %p124, %p125
    %p127 = scmp.ne.s32.totalorder %s113, %s114
    %p128 = scmp.eq.s32.totalorder %s17, 3
    %p129 = por %p127, %p128
    %p131 = scmp.ne.s32.totalorder %s114, %s130
    %p132 = scmp.eq.s32.totalorder %s17, 0
    %p133 = por %p131, %p132
    %s134 = ssub.s32 %s11, %s18
    %p135 = scmp.eq.s32.totalorder %s134, 0
    %s137 = sadd.s32 %s136, 1
    %s138 = scalar_select %p135, %s136, %s137
    %p141 = pneg %p135
    %p142 = scmp.eq.s32.totalorder %s11, 3
    %p143 = por %p141, %p142
    %p144 = scmp.ne.s32.totalorder %s136, %s139
    %p145 = scmp.eq.s32.totalorder %s11, 0
    %p146 = por %p144, %p145
    %p147 = scmp.ne.s32.totalorder %s136, %s139
    %p148 = scmp.eq.s32.totalorder %s16, 3
    %p149 = por %p147, %p148
    %p150 = scmp.ne.s32.totalorder %s139, %s140
    %p151 = scmp.eq.s32.totalorder %s16, 0
    %p152 = por %p150, %p151
    %p153 = scmp.ne.s32.totalorder %s139, %s140
    %p154 = scmp.eq.s32.totalorder %s17, 3
    %p155 = por %p153, %p154
    %p157 = scmp.ne.s32.totalorder %s140, %s156
    %p158 = scmp.eq.s32.totalorder %s17, 0
    %p159 = por %p157, %p158
    %p160 = scmp.le.s32.totalorder 1, %s11
    %p161 = scmp.lt.s32.totalorder %s11, 5
    %p162 = pnand %p160, %p161
    %p163 = pneg %p162
    // Predicated region
    $region9: #{resgat_forward.9} parent=5 // pred_check
      _
    $region10: #{resgat_forward.9} parent=5 // pred_check_branch
      %165 = sbr.rel (%p162) target = $region12
    $region11: #{resgat_forward.9} parent=5 // pred_region
      %s166 = ssub.s32 %s11, 1
      // Predicated region
      $region13: #{resgat_forward.9} parent=11 // pred_check
        %p167 = pneg %p32
      $region14: #{resgat_forward.9} parent=11 // pred_check_branch
        %169 = sbr.rel (%p167) target = $region16
      $region15: #{resgat_forward.9} parent=11 // pred_region
        _
      $region16: #{resgat_forward.9} parent=11 // pred_fallthru
        _
      // Predicated region
      $region17: #{resgat_forward.9} parent=11 // pred_check
        %p170 = pneg %p53
      $region18: #{resgat_forward.9} parent=11 // pred_check_branch
        %172 = sbr.rel (%p170) target = $region20
      $region19: #{resgat_forward.9} parent=11 // pred_region
        _
      $region20: #{resgat_forward.9} parent=11 // pred_fallthru
        _
      // Predicated region
      $region21: #{resgat_forward.9} parent=11 // pred_check
        %p173 = pneg %p74
      $region22: #{resgat_forward.9} parent=11 // pred_check_branch
        %175 = sbr.rel (%p173) target = $region24
      $region23: #{resgat_forward.9} parent=11 // pred_region
        _
      $region24: #{resgat_forward.9} parent=11 // pred_fallthru
        _
    $region12: #{resgat_forward.9} parent=5 // pred_fallthru
      _
    %p176 = scmp.lt.s32.totalorder %s11, 4
    // Predicated region
    $region25: #{resgat_forward.9} parent=5 // pred_check
      %p177 = pneg %p176
    $region26: #{resgat_forward.9} parent=5 // pred_check_branch
      %179 = sbr.rel (%p177) target = $region28
    $region27: #{resgat_forward.9} parent=5 // pred_region
      // Predicated region
      $region29: #{resgat_forward.9} parent=27 // pred_check
        %p180 = pneg %p94
      $region30: #{resgat_forward.9} parent=27 // pred_check_branch
        %182 = sbr.rel (%p180) target = $region32
      $region31: #{resgat_forward.9} parent=27 // pred_region
        %s183 = smul.u32 8, %s11
        %p184 = scmp.lt.s32.totalorder %s183, 31
        %s185 = scalar_select %p184, %s183, 31
        %s186 = smul.addr %s185, 8
        %s187 = scalar_lea.vmem %s3, %s186
        %s188 = smul.u32 8, %s11
      $region32: #{resgat_forward.9} parent=27 // pred_fallthru
        _
      // Predicated region
      $region33: #{resgat_forward.9} parent=27 // pred_check
        %p189 = pneg %p120
      $region34: #{resgat_forward.9} parent=27 // pred_check_branch
        %191 = sbr.rel (%p189) target = $region36
      $region35: #{resgat_forward.9} parent=27 // pred_region
        %s192 = smul.u32 8, %s11
        %p193 = scmp.lt.s32.totalorder %s192, 31
        %s194 = scalar_select %p193, %s192, 31
        %s195 = smul.addr %s194, 2
        %s196 = smul.addr %s195, 4
        %s197 = scalar_lea.vmem %s4, %s196
        %s198 = smul.u32 8, %s11
      $region36: #{resgat_forward.9} parent=27 // pred_fallthru
        _
    $region28: #{resgat_forward.9} parent=5 // pred_fallthru
      _
    %p199 = scmp.le.s32.totalorder 1, %s11
    %p200 = scmp.lt.s32.totalorder %s11, 5
    %p201 = pnand %p199, %p200
    %p202 = pneg %p201
    // Predicated region
    $region37: #{resgat_forward.9} parent=5 // pred_check
      _
    $region38: #{resgat_forward.9} parent=5 // pred_check_branch
      %204 = sbr.rel (%p201) target = $region40
    $region39: #{resgat_forward.9} parent=5 // pred_region
      %s205 = ssub.s32 %s11, 1
      %p206 = pneg %p32
      %p207 = pneg %p29
      %p208 = pneg %p53
      %p209 = pneg %p50
      %p210 = pneg %p74
      %p211 = pneg %p71
      %s212 = smul.u32 8, %s16
      %p213 = scmp.lt.s32.totalorder %s212, 31
      %s214 = scalar_select %p213, %s212, 31
      %s215 = smul.addr %s214, 8
      %s216 = scalar_lea.vmem %s3, %s215
      %p217 = pneg %p100
      %p218 = pneg %p97
      %s219 = smul.u32 8, %s16
      %p220 = scmp.lt.s32.totalorder %s219, 31
      %s221 = scalar_select %p220, %s219, 31
      %s222 = smul.addr %s221, 2
      %s223 = smul.addr %s222, 4
      %s224 = scalar_lea.vmem %s4, %s223
      %p225 = pneg %p126
      %p226 = pneg %p123
      %p227 = pneg %p152
      %p228 = pneg %p149
      %s229 = smul.u32 8, %s16
      %p230 = scmp.lt.s32.totalorder %s229, 31
      %s231 = scalar_select %p230, %s229, 31
      %s232 = smul.addr %s231, 8
      %s233 = scalar_lea.vmem %s5, %s232
      %s234 = smul.u32 8, %s16
      %p235 = scmp.lt.s32.totalorder %s234, 31
      %s236 = scalar_select %p235, %s234, 31
      %s237 = smul.addr %s236, 8
      %s238 = scalar_lea.vmem %s3, %s237
      %s239 = smul.u32 8, %s16
      %s240 = smul.u32 8, %s16
      %p241 = scmp.lt.s32.totalorder %s240, 31
      %s242 = scalar_select %p241, %s240, 31
      %s243 = smul.addr %s242, 2
      %s244 = smul.addr %s243, 4
      %s245 = scalar_lea.vmem %s4, %s244
      %s246 = smul.u32 8, %s16
      %s247 = smul.u32 8, %s16
      %p248 = scmp.lt.s32.totalorder %s247, 31
      %s249 = scalar_select %p248, %s247, 31
      %s250 = smul.addr %s249, 8
      %s251 = scalar_lea.vmem %s5, %s250
      %s252 = smul.u32 8, %s16
      %v253 = vld [vmem:[%s245] sm:$0xff]
      %v254 = vld [vmem:[%s245 + $0x8] sm:$0xff]
      %v255 = vld [vmem:[%s245 + $0x10] sm:$0xff]
      %v256 = vld [vmem:[%s245 + $0x18] sm:$0xff]
      %v257 = vld [vmem:[%s245 + $0x20] sm:$0xff]
      %v258 = vld [vmem:[%s245 + $0x28] sm:$0xff]
      %v259 = vld [vmem:[%s245 + $0x30] sm:$0xff]
      %v260 = vld [vmem:[%s245 + $0x38] sm:$0xff]
      %v261 = vunpack.c.l.bf16 %v253
      %v262 = vunpack.c.h.bf16 %v253
      %v263 = vunpack.c.l.bf16 %v254
      %v264 = vunpack.c.h.bf16 %v254
      %v265 = vunpack.c.l.bf16 %v255
      %v266 = vunpack.c.h.bf16 %v255
      %v267 = vunpack.c.l.bf16 %v256
      %v268 = vunpack.c.h.bf16 %v256
      %v269 = vunpack.c.l.bf16 %v257
      %v270 = vunpack.c.h.bf16 %v257
      %v271 = vunpack.c.l.bf16 %v258
      %v272 = vunpack.c.h.bf16 %v258
      %v273 = vunpack.c.l.bf16 %v259
      %v274 = vunpack.c.h.bf16 %v259
      %v275 = vunpack.c.l.bf16 %v260
      %v276 = vunpack.c.h.bf16 %v260
      %v277 = vld [vmem:[%s238] sm:$0xff]
      %v278 = vld [vmem:[%s238 + $0x8] sm:$0xff]
      %v279 = vld [vmem:[%s238 + $0x10] sm:$0xff]
      %v280 = vld [vmem:[%s238 + $0x18] sm:$0xff]
      %v281 = vld [vmem:[%s238 + $0x20] sm:$0xff]
      %v282 = vld [vmem:[%s238 + $0x28] sm:$0xff]
      %v283 = vld [vmem:[%s238 + $0x30] sm:$0xff]
      %v284 = vld [vmem:[%s238 + $0x38] sm:$0xff]
      %v285 = vld [vmem:[%s1] ss:$2 sm:$0x3]
      %287 = vset.pattern.permute.xlu0 0
      %288 = vperm.xlu0 %287, %v277
      %v289 = vpop.permute.xlu0 %288
      %292 = vset.pattern.permute.xlu0 0
      %293 = vperm.xlu0 %292, %v278
      %v294 = vpop.permute.xlu0 %293
      %297 = vset.pattern.permute.xlu0 0
      %298 = vperm.xlu0 %297, %v279
      %v299 = vpop.permute.xlu0 %298
      %302 = vset.pattern.permute.xlu0 0
      %303 = vperm.xlu0 %302, %v280
      %v304 = vpop.permute.xlu0 %303
      %307 = vset.pattern.permute.xlu0 0
      %308 = vperm.xlu0 %307, %v281
      %v309 = vpop.permute.xlu0 %308
      %312 = vset.pattern.permute.xlu0 0
      %313 = vperm.xlu0 %312, %v282
      %v314 = vpop.permute.xlu0 %313
      %317 = vset.pattern.permute.xlu0 0
      %318 = vperm.xlu0 %317, %v283
      %v319 = vpop.permute.xlu0 %318
      %322 = vset.pattern.permute.xlu0 0
      %323 = vperm.xlu0 %322, %v284
      %v324 = vpop.permute.xlu0 %323
      %v327 = vperm.slane %v285, 0
      %v328 = vperm.slane %v285, 1
      %v331 = vadd.f32 %v289, %v327
      %v332 = vadd.f32 %v289, %v328
      %v333 = vadd.f32 %v294, %v327
      %v334 = vadd.f32 %v294, %v328
      %v335 = vadd.f32 %v299, %v327
      %v336 = vadd.f32 %v299, %v328
      %v337 = vadd.f32 %v304, %v327
      %v338 = vadd.f32 %v304, %v328
      %v339 = vadd.f32 %v309, %v327
      %v340 = vadd.f32 %v309, %v328
      %v341 = vadd.f32 %v314, %v327
      %v342 = vadd.f32 %v314, %v328
      %v343 = vadd.f32 %v319, %v327
      %v344 = vadd.f32 %v319, %v328
      %v345 = vadd.f32 %v324, %v327
      %v346 = vadd.f32 %v324, %v328
      %v347 = vmul.f32 %v331, 0.2
      %v348 = vmul.f32 %v332, 0.2
      %v349 = vmul.f32 %v333, 0.2
      %v350 = vmul.f32 %v334, 0.2
      %v351 = vmul.f32 %v335, 0.2
      %v352 = vmul.f32 %v336, 0.2
      %v353 = vmul.f32 %v337, 0.2
      %v354 = vmul.f32 %v338, 0.2
      %v355 = vmul.f32 %v339, 0.2
      %v356 = vmul.f32 %v340, 0.2
      %v357 = vmul.f32 %v341, 0.2
      %v358 = vmul.f32 %v342, 0.2
      %v359 = vmul.f32 %v343, 0.2
      %v360 = vmul.f32 %v344, 0.2
      %v361 = vmul.f32 %v345, 0.2
      %v362 = vmul.f32 %v346, 0.2
      %v363 = vmax.f32 %v331, %v347
      %v364 = vmax.f32 %v332, %v348
      %v365 = vmax.f32 %v333, %v349
      %v366 = vmax.f32 %v334, %v350
      %v367 = vmax.f32 %v335, %v351
      %v368 = vmax.f32 %v336, %v352
      %v369 = vmax.f32 %v337, %v353
      %v370 = vmax.f32 %v338, %v354
      %v371 = vmax.f32 %v339, %v355
      %v372 = vmax.f32 %v340, %v356
      %v373 = vmax.f32 %v341, %v357
      %v374 = vmax.f32 %v342, %v358
      %v375 = vmax.f32 %v343, %v359
      %v376 = vmax.f32 %v344, %v360
      %v377 = vmax.f32 %v345, %v361
      %v378 = vmax.f32 %v346, %v362
      %v379 = vadd.f32 %v363, %v261
      %v380 = vadd.f32 %v364, %v262
      %v381 = vadd.f32 %v365, %v263
      %v382 = vadd.f32 %v366, %v264
      %v383 = vadd.f32 %v367, %v265
      %v384 = vadd.f32 %v368, %v266
      %v385 = vadd.f32 %v369, %v267
      %v386 = vadd.f32 %v370, %v268
      %v387 = vadd.f32 %v371, %v269
      %v388 = vadd.f32 %v372, %v270
      %v389 = vadd.f32 %v373, %v271
      %v390 = vadd.f32 %v374, %v272
      %v391 = vadd.f32 %v375, %v273
      %v392 = vadd.f32 %v376, %v274
      %v393 = vadd.f32 %v377, %v275
      %v394 = vadd.f32 %v378, %v276
      %v395 = vmax.f32 %v379, %v380
      %396 = vmax.xlane.f32.xlu0 %v395
      %v397 = vpop.xlane.xlu0 %396
      %v398 = vmax.f32 %v381, %v382
      %399 = vmax.xlane.f32.xlu0 %v398
      %v400 = vpop.xlane.xlu0 %399
      %v401 = vmax.f32 %v383, %v384
      %402 = vmax.xlane.f32.xlu0 %v401
      %v403 = vpop.xlane.xlu0 %402
      %v404 = vmax.f32 %v385, %v386
      %405 = vmax.xlane.f32.xlu0 %v404
      %v406 = vpop.xlane.xlu0 %405
      %v407 = vmax.f32 %v387, %v388
      %408 = vmax.xlane.f32.xlu0 %v407
      %v409 = vpop.xlane.xlu0 %408
      %v410 = vmax.f32 %v389, %v390
      %411 = vmax.xlane.f32.xlu0 %v410
      %v412 = vpop.xlane.xlu0 %411
      %v413 = vmax.f32 %v391, %v392
      %414 = vmax.xlane.f32.xlu0 %v413
      %v415 = vpop.xlane.xlu0 %414
      %v416 = vmax.f32 %v393, %v394
      %417 = vmax.xlane.f32.xlu0 %v416
      %v418 = vpop.xlane.xlu0 %417
      %v419 = vsub.f32 %v379, %v397
      %v420 = vsub.f32 %v380, %v397
      %v421 = vsub.f32 %v381, %v400
      %v422 = vsub.f32 %v382, %v400
      %v423 = vsub.f32 %v383, %v403
      %v424 = vsub.f32 %v384, %v403
      %v425 = vsub.f32 %v385, %v406
      %v426 = vsub.f32 %v386, %v406
      %v427 = vsub.f32 %v387, %v409
      %v428 = vsub.f32 %v388, %v409
      %v429 = vsub.f32 %v389, %v412
      %v430 = vsub.f32 %v390, %v412
      %v431 = vsub.f32 %v391, %v415
      %v432 = vsub.f32 %v392, %v415
      %v433 = vsub.f32 %v393, %v418
      %v434 = vsub.f32 %v394, %v418
      %v435 = vmul.f32 %v419, 1.442695
      %v436 = vpow.pop %v435
      %v437 = vmul.f32 %v420, 1.442695
      %v438 = vpow.pop %v437
      %v439 = vmul.f32 %v421, 1.442695
      %v440 = vpow.pop %v439
      %v441 = vmul.f32 %v422, 1.442695
      %v442 = vpow.pop %v441
      %v443 = vmul.f32 %v423, 1.442695
      %v444 = vpow.pop %v443
      %v445 = vmul.f32 %v424, 1.442695
      %v446 = vpow.pop %v445
      %v447 = vmul.f32 %v425, 1.442695
      %v448 = vpow.pop %v447
      %v449 = vmul.f32 %v426, 1.442695
      %v450 = vpow.pop %v449
      %v451 = vmul.f32 %v427, 1.442695
      %v452 = vpow.pop %v451
      %v453 = vmul.f32 %v428, 1.442695
      %v454 = vpow.pop %v453
      %v455 = vmul.f32 %v429, 1.442695
      %v456 = vpow.pop %v455
      %v457 = vmul.f32 %v430, 1.442695
      %v458 = vpow.pop %v457
      %v459 = vmul.f32 %v431, 1.442695
      %v460 = vpow.pop %v459
      %v461 = vmul.f32 %v432, 1.442695
      %v462 = vpow.pop %v461
      %v463 = vmul.f32 %v433, 1.442695
      %v464 = vpow.pop %v463
      %v465 = vmul.f32 %v434, 1.442695
      %v466 = vpow.pop %v465
      %v467 = vadd.f32 %v436, %v438
      %468 = vadd.xlane.f32.xlu0 %v467
      %v469 = vpop.xlane.xlu0 %468
      %v470 = vadd.f32 %v440, %v442
      %471 = vadd.xlane.f32.xlu0 %v470
      %v472 = vpop.xlane.xlu0 %471
      %v473 = vadd.f32 %v444, %v446
      %474 = vadd.xlane.f32.xlu0 %v473
      %v475 = vpop.xlane.xlu0 %474
      %v476 = vadd.f32 %v448, %v450
      %477 = vadd.xlane.f32.xlu0 %v476
      %v478 = vpop.xlane.xlu0 %477
      %v479 = vadd.f32 %v452, %v454
      %480 = vadd.xlane.f32.xlu0 %v479
      %v481 = vpop.xlane.xlu0 %480
      %v482 = vadd.f32 %v456, %v458
      %483 = vadd.xlane.f32.xlu0 %v482
      %v484 = vpop.xlane.xlu0 %483
      %v485 = vadd.f32 %v460, %v462
      %486 = vadd.xlane.f32.xlu0 %v485
      %v487 = vpop.xlane.xlu0 %486
      %v488 = vadd.f32 %v464, %v466
      %489 = vadd.xlane.f32.xlu0 %v488
      %v490 = vpop.xlane.xlu0 %489
      %v491 = vpack.c.bf16 %v440, %v436
      %v492 = vpack.c.bf16 %v442, %v438
      %v493 = vpack.c.bf16 %v448, %v444
      %v494 = vpack.c.bf16 %v450, %v446
      %v495 = vpack.c.bf16 %v456, %v452
      %v496 = vpack.c.bf16 %v458, %v454
      %v497 = vpack.c.bf16 %v464, %v460
      %v498 = vpack.c.bf16 %v466, %v462
      %v499 = vld [vmem:[%s0] sm:$0xf]
      %v500 = vld [vmem:[%s0 + $0x4] sm:$0xf]
      %v501 = vld [vmem:[%s0 + $0x8] sm:$0xf]
      %v502 = vld [vmem:[%s0 + $0xc] sm:$0xf]
      %v503 = vld [vmem:[%s0 + $0x10] sm:$0xf]
      %v504 = vld [vmem:[%s0 + $0x14] sm:$0xf]
      %v505 = vld [vmem:[%s0 + $0x18] sm:$0xf]
      %v506 = vld [vmem:[%s0 + $0x1c] sm:$0xf]
      %v507 = vld [vmem:[%s0 + $0x20] sm:$0xf]
      %v508 = vld [vmem:[%s0 + $0x24] sm:$0xf]
      %v509 = vld [vmem:[%s0 + $0x28] sm:$0xf]
      %v510 = vld [vmem:[%s0 + $0x2c] sm:$0xf]
      %v511 = vld [vmem:[%s0 + $0x30] sm:$0xf]
      %v512 = vld [vmem:[%s0 + $0x34] sm:$0xf]
      %v513 = vld [vmem:[%s0 + $0x38] sm:$0xf]
      %v514 = vld [vmem:[%s0 + $0x3c] sm:$0xf]
      %v515 = vld [vmem:[%s0 + $0x40] sm:$0xf]
      %v516 = vld [vmem:[%s0 + $0x44] sm:$0xf]
      %v517 = vld [vmem:[%s0 + $0x48] sm:$0xf]
      %v518 = vld [vmem:[%s0 + $0x4c] sm:$0xf]
      %v519 = vld [vmem:[%s0 + $0x50] sm:$0xf]
      %v520 = vld [vmem:[%s0 + $0x54] sm:$0xf]
      %v521 = vld [vmem:[%s0 + $0x58] sm:$0xf]
      %v522 = vld [vmem:[%s0 + $0x5c] sm:$0xf]
      %v523 = vld [vmem:[%s0 + $0x60] sm:$0xf]
      %v524 = vld [vmem:[%s0 + $0x64] sm:$0xf]
      %v525 = vld [vmem:[%s0 + $0x68] sm:$0xf]
      %v526 = vld [vmem:[%s0 + $0x6c] sm:$0xf]
      %v527 = vld [vmem:[%s0 + $0x70] sm:$0xf]
      %v528 = vld [vmem:[%s0 + $0x74] sm:$0xf]
      %v529 = vld [vmem:[%s0 + $0x78] sm:$0xf]
      %v530 = vld [vmem:[%s0 + $0x7c] sm:$0xf]
      %v563 = vunpack.c.l.b16 %v499
      %v564 = vunpack.c.l.b16 %v500
      %v565 = vunpack.c.l.b16 %v501
      %v566 = vunpack.c.l.b16 %v502
      %v567 = vunpack.c.l.b16 %v503
      %v568 = vunpack.c.l.b16 %v504
      %v569 = vunpack.c.l.b16 %v505
      %v570 = vunpack.c.l.b16 %v506
      %v571 = vunpack.c.l.b16 %v507
      %v572 = vunpack.c.l.b16 %v508
      %v573 = vunpack.c.l.b16 %v509
      %v574 = vunpack.c.l.b16 %v510
      %v575 = vunpack.c.l.b16 %v511
      %v576 = vunpack.c.l.b16 %v512
      %v577 = vunpack.c.l.b16 %v513
      %v578 = vunpack.c.l.b16 %v514
      %v579 = vunpack.c.l.b16 %v515
      %v580 = vunpack.c.l.b16 %v516
      %v581 = vunpack.c.l.b16 %v517
      %v582 = vunpack.c.l.b16 %v518
      %v583 = vunpack.c.l.b16 %v519
      %v584 = vunpack.c.l.b16 %v520
      %v585 = vunpack.c.l.b16 %v521
      %v586 = vunpack.c.l.b16 %v522
      %v587 = vunpack.c.l.b16 %v523
      %v588 = vunpack.c.l.b16 %v524
      %v589 = vunpack.c.l.b16 %v525
      %v590 = vunpack.c.l.b16 %v526
      %v591 = vunpack.c.l.b16 %v527
      %v592 = vunpack.c.l.b16 %v528
      %v593 = vunpack.c.l.b16 %v529
      %v594 = vunpack.c.l.b16 %v530
      %v595 = vpack.c.b16 %v564, %v563
      %v596 = vpack.c.b16 %v566, %v565
      %v597 = vpack.c.b16 %v568, %v567
      %v598 = vpack.c.b16 %v570, %v569
      %v599 = vpack.c.b16 %v572, %v571
      %v600 = vpack.c.b16 %v574, %v573
      %v601 = vpack.c.b16 %v576, %v575
      %v602 = vpack.c.b16 %v578, %v577
      %v603 = vpack.c.b16 %v580, %v579
      %v604 = vpack.c.b16 %v582, %v581
      %v605 = vpack.c.b16 %v584, %v583
      %v606 = vpack.c.b16 %v586, %v585
      %v607 = vpack.c.b16 %v588, %v587
      %v608 = vpack.c.b16 %v590, %v589
      %v609 = vpack.c.b16 %v592, %v591
      %v610 = vpack.c.b16 %v594, %v593
      %627 = vmatpush.bf16.msra.mxu0 %v602
      %628 = vmatpush.bf16.msra.mxu0 %v601
      %629 = vmatpush.bf16.msra.mxu0 %v600
      %630 = vmatpush.bf16.msra.mxu0 %v599
      %631 = vmatpush.bf16.msra.mxu0 %v598
      %632 = vmatpush.bf16.msra.mxu0 %v597
      %633 = vmatpush.bf16.msra.mxu0 %v596
      %634 = vmatpush.bf16.msra.mxu0 %v595
      %635 = vmatmul.bf16.gmra.mxu0 %v491
      %v636 = vpop.f32.mrf.mxu0
      %v637 = vadd.f32 0.0, %v636
      %v638 = vpop.f32.mrf.mxu0
      %v639 = vadd.f32 0.0, %v638
      %640 = vmatmul.bf16.gmra.mxu0 %v493
      %v641 = vpop.f32.mrf.mxu0
      %v642 = vadd.f32 0.0, %v641
      %v643 = vpop.f32.mrf.mxu0
      %v644 = vadd.f32 0.0, %v643
      %645 = vmatmul.bf16.gmra.mxu0 %v495
      %v646 = vpop.f32.mrf.mxu0
      %v647 = vadd.f32 0.0, %v646
      %v648 = vpop.f32.mrf.mxu0
      %v649 = vadd.f32 0.0, %v648
      %650 = vmatmul.bf16.gmra.mxu0 %v497
      %v651 = vpop.f32.mrf.mxu0
      %v652 = vadd.f32 0.0, %v651
      %v653 = vpop.f32.mrf.mxu0
      %v654 = vadd.f32 0.0, %v653
      %655 = vdwg.mxu0
      %656 = vmatpush.bf16.msra.mxu0 %v610
      %657 = vmatpush.bf16.msra.mxu0 %v609
      %658 = vmatpush.bf16.msra.mxu0 %v608
      %659 = vmatpush.bf16.msra.mxu0 %v607
      %660 = vmatpush.bf16.msra.mxu0 %v606
      %661 = vmatpush.bf16.msra.mxu0 %v605
      %662 = vmatpush.bf16.msra.mxu0 %v604
      %663 = vmatpush.bf16.msra.mxu0 %v603
      %664 = vmatmul.bf16.gmra.mxu0 %v492
      %v665 = vpop.f32.mrf.mxu0
      %v666 = vadd.f32 %v637, %v665
      %v667 = vpop.f32.mrf.mxu0
      %v668 = vadd.f32 %v639, %v667
      %669 = vmatmul.bf16.gmra.mxu0 %v494
      %v670 = vpop.f32.mrf.mxu0
      %v671 = vadd.f32 %v642, %v670
      %v672 = vpop.f32.mrf.mxu0
      %v673 = vadd.f32 %v644, %v672
      %674 = vmatmul.bf16.gmra.mxu0 %v496
      %v675 = vpop.f32.mrf.mxu0
      %v676 = vadd.f32 %v647, %v675
      %v677 = vpop.f32.mrf.mxu0
      %v678 = vadd.f32 %v649, %v677
      %679 = vmatmul.bf16.gmra.mxu0 %v498
      %v680 = vpop.f32.mrf.mxu0
      %v681 = vadd.f32 %v652, %v680
      %v682 = vpop.f32.mrf.mxu0
      %v683 = vadd.f32 %v654, %v682
      %684 = vdwg.mxu0
      %v685 = vrcp.pop %v469
      %v686 = vrcp.pop %v472
      %v687 = vrcp.pop %v475
      %v688 = vrcp.pop %v478
      %v689 = vrcp.pop %v481
      %v690 = vrcp.pop %v484
      %v691 = vrcp.pop %v487
      %v692 = vrcp.pop %v490
      %v693 = vmul.f32 %v666, %v685
      %v694 = vmul.f32 %v668, %v686
      %v695 = vmul.f32 %v671, %v687
      %v696 = vmul.f32 %v673, %v688
      %v697 = vmul.f32 %v676, %v689
      %v698 = vmul.f32 %v678, %v690
      %v699 = vmul.f32 %v681, %v691
      %v700 = vmul.f32 %v683, %v692
      %v701 = vld [vmem:[%s2] sm:$0x1]
      %v703 = vperm.slane %v701, 0
      %v705 = vadd.f32 %v693, %v703
      %v706 = vadd.f32 %v694, %v703
      %v707 = vadd.f32 %v695, %v703
      %v708 = vadd.f32 %v696, %v703
      %v709 = vadd.f32 %v697, %v703
      %v710 = vadd.f32 %v698, %v703
      %v711 = vadd.f32 %v699, %v703
      %v712 = vadd.f32 %v700, %v703
      %s713 = scalar_lea.vmem %s1, 1
      %v714 = vld [vmem:[%s713] ss:$2 sm:$0x3]
      %715 = vset.pattern.permute.xlu0 1
      %716 = vperm.xlu0 %715, %v277
      %v717 = vpop.permute.xlu0 %716
      %719 = vset.pattern.permute.xlu0 1
      %720 = vperm.xlu0 %719, %v278
      %v721 = vpop.permute.xlu0 %720
      %723 = vset.pattern.permute.xlu0 1
      %724 = vperm.xlu0 %723, %v279
      %v725 = vpop.permute.xlu0 %724
      %727 = vset.pattern.permute.xlu0 1
      %728 = vperm.xlu0 %727, %v280
      %v729 = vpop.permute.xlu0 %728
      %731 = vset.pattern.permute.xlu0 1
      %732 = vperm.xlu0 %731, %v281
      %v733 = vpop.permute.xlu0 %732
      %735 = vset.pattern.permute.xlu0 1
      %736 = vperm.xlu0 %735, %v282
      %v737 = vpop.permute.xlu0 %736
      %739 = vset.pattern.permute.xlu0 1
      %740 = vperm.xlu0 %739, %v283
      %v741 = vpop.permute.xlu0 %740
      %743 = vset.pattern.permute.xlu0 1
      %744 = vperm.xlu0 %743, %v284
      %v745 = vpop.permute.xlu0 %744
      %v748 = vperm.slane %v714, 0
      %v749 = vperm.slane %v714, 1
      %v752 = vadd.f32 %v717, %v748
      %v753 = vadd.f32 %v717, %v749
      %v754 = vadd.f32 %v721, %v748
      %v755 = vadd.f32 %v721, %v749
      %v756 = vadd.f32 %v725, %v748
      %v757 = vadd.f32 %v725, %v749
      %v758 = vadd.f32 %v729, %v748
      %v759 = vadd.f32 %v729, %v749
      %v760 = vadd.f32 %v733, %v748
      %v761 = vadd.f32 %v733, %v749
      %v762 = vadd.f32 %v737, %v748
      %v763 = vadd.f32 %v737, %v749
      %v764 = vadd.f32 %v741, %v748
      %v765 = vadd.f32 %v741, %v749
      %v766 = vadd.f32 %v745, %v748
      %v767 = vadd.f32 %v745, %v749
      %v768 = vmul.f32 %v752, 0.2
      %v769 = vmul.f32 %v753, 0.2
      %v770 = vmul.f32 %v754, 0.2
      %v771 = vmul.f32 %v755, 0.2
      %v772 = vmul.f32 %v756, 0.2
      %v773 = vmul.f32 %v757, 0.2
      %v774 = vmul.f32 %v758, 0.2
      %v775 = vmul.f32 %v759, 0.2
      %v776 = vmul.f32 %v760, 0.2
      %v777 = vmul.f32 %v761, 0.2
      %v778 = vmul.f32 %v762, 0.2
      %v779 = vmul.f32 %v763, 0.2
      %v780 = vmul.f32 %v764, 0.2
      %v781 = vmul.f32 %v765, 0.2
      %v782 = vmul.f32 %v766, 0.2
      %v783 = vmul.f32 %v767, 0.2
      %v784 = vmax.f32 %v752, %v768
      %v785 = vmax.f32 %v753, %v769
      %v786 = vmax.f32 %v754, %v770
      %v787 = vmax.f32 %v755, %v771
      %v788 = vmax.f32 %v756, %v772
      %v789 = vmax.f32 %v757, %v773
      %v790 = vmax.f32 %v758, %v774
      %v791 = vmax.f32 %v759, %v775
      %v792 = vmax.f32 %v760, %v776
      %v793 = vmax.f32 %v761, %v777
      %v794 = vmax.f32 %v762, %v778
      %v795 = vmax.f32 %v763, %v779
      %v796 = vmax.f32 %v764, %v780
      %v797 = vmax.f32 %v765, %v781
      %v798 = vmax.f32 %v766, %v782
      %v799 = vmax.f32 %v767, %v783
      %v800 = vadd.f32 %v784, %v261
      %v801 = vadd.f32 %v785, %v262
      %v802 = vadd.f32 %v786, %v263
      %v803 = vadd.f32 %v787, %v264
      %v804 = vadd.f32 %v788, %v265
      %v805 = vadd.f32 %v789, %v266
      %v806 = vadd.f32 %v790, %v267
      %v807 = vadd.f32 %v791, %v268
      %v808 = vadd.f32 %v792, %v269
      %v809 = vadd.f32 %v793, %v270
      %v810 = vadd.f32 %v794, %v271
      %v811 = vadd.f32 %v795, %v272
      %v812 = vadd.f32 %v796, %v273
      %v813 = vadd.f32 %v797, %v274
      %v814 = vadd.f32 %v798, %v275
      %v815 = vadd.f32 %v799, %v276
      %v816 = vmax.f32 %v800, %v801
      %817 = vmax.xlane.f32.xlu0 %v816
      %v818 = vpop.xlane.xlu0 %817
      %v819 = vmax.f32 %v802, %v803
      %820 = vmax.xlane.f32.xlu0 %v819
      %v821 = vpop.xlane.xlu0 %820
      %v822 = vmax.f32 %v804, %v805
      %823 = vmax.xlane.f32.xlu0 %v822
      %v824 = vpop.xlane.xlu0 %823
      %v825 = vmax.f32 %v806, %v807
      %826 = vmax.xlane.f32.xlu0 %v825
      %v827 = vpop.xlane.xlu0 %826
      %v828 = vmax.f32 %v808, %v809
      %829 = vmax.xlane.f32.xlu0 %v828
      %v830 = vpop.xlane.xlu0 %829
      %v831 = vmax.f32 %v810, %v811
      %832 = vmax.xlane.f32.xlu0 %v831
      %v833 = vpop.xlane.xlu0 %832
      %v834 = vmax.f32 %v812, %v813
      %835 = vmax.xlane.f32.xlu0 %v834
      %v836 = vpop.xlane.xlu0 %835
      %v837 = vmax.f32 %v814, %v815
      %838 = vmax.xlane.f32.xlu0 %v837
      %v839 = vpop.xlane.xlu0 %838
      %v840 = vsub.f32 %v800, %v818
      %v841 = vsub.f32 %v801, %v818
      %v842 = vsub.f32 %v802, %v821
      %v843 = vsub.f32 %v803, %v821
      %v844 = vsub.f32 %v804, %v824
      %v845 = vsub.f32 %v805, %v824
      %v846 = vsub.f32 %v806, %v827
      %v847 = vsub.f32 %v807, %v827
      %v848 = vsub.f32 %v808, %v830
      %v849 = vsub.f32 %v809, %v830
      %v850 = vsub.f32 %v810, %v833
      %v851 = vsub.f32 %v811, %v833
      %v852 = vsub.f32 %v812, %v836
      %v853 = vsub.f32 %v813, %v836
      %v854 = vsub.f32 %v814, %v839
      %v855 = vsub.f32 %v815, %v839
      %v856 = vmul.f32 %v840, 1.442695
      %v857 = vpow.pop %v856
      %v858 = vmul.f32 %v841, 1.442695
      %v859 = vpow.pop %v858
      %v860 = vmul.f32 %v842, 1.442695
      %v861 = vpow.pop %v860
      %v862 = vmul.f32 %v843, 1.442695
      %v863 = vpow.pop %v862
      %v864 = vmul.f32 %v844, 1.442695
      %v865 = vpow.pop %v864
      %v866 = vmul.f32 %v845, 1.442695
      %v867 = vpow.pop %v866
      %v868 = vmul.f32 %v846, 1.442695
      %v869 = vpow.pop %v868
      %v870 = vmul.f32 %v847, 1.442695
      %v871 = vpow.pop %v870
      %v872 = vmul.f32 %v848, 1.442695
      %v873 = vpow.pop %v872
      %v874 = vmul.f32 %v849, 1.442695
      %v875 = vpow.pop %v874
      %v876 = vmul.f32 %v850, 1.442695
      %v877 = vpow.pop %v876
      %v878 = vmul.f32 %v851, 1.442695
      %v879 = vpow.pop %v878
      %v880 = vmul.f32 %v852, 1.442695
      %v881 = vpow.pop %v880
      %v882 = vmul.f32 %v853, 1.442695
      %v883 = vpow.pop %v882
      %v884 = vmul.f32 %v854, 1.442695
      %v885 = vpow.pop %v884
      %v886 = vmul.f32 %v855, 1.442695
      %v887 = vpow.pop %v886
      %v888 = vadd.f32 %v857, %v859
      %889 = vadd.xlane.f32.xlu0 %v888
      %v890 = vpop.xlane.xlu0 %889
      %v891 = vadd.f32 %v861, %v863
      %892 = vadd.xlane.f32.xlu0 %v891
      %v893 = vpop.xlane.xlu0 %892
      %v894 = vadd.f32 %v865, %v867
      %895 = vadd.xlane.f32.xlu0 %v894
      %v896 = vpop.xlane.xlu0 %895
      %v897 = vadd.f32 %v869, %v871
      %898 = vadd.xlane.f32.xlu0 %v897
      %v899 = vpop.xlane.xlu0 %898
      %v900 = vadd.f32 %v873, %v875
      %901 = vadd.xlane.f32.xlu0 %v900
      %v902 = vpop.xlane.xlu0 %901
      %v903 = vadd.f32 %v877, %v879
      %904 = vadd.xlane.f32.xlu0 %v903
      %v905 = vpop.xlane.xlu0 %904
      %v906 = vadd.f32 %v881, %v883
      %907 = vadd.xlane.f32.xlu0 %v906
      %v908 = vpop.xlane.xlu0 %907
      %v909 = vadd.f32 %v885, %v887
      %910 = vadd.xlane.f32.xlu0 %v909
      %v911 = vpop.xlane.xlu0 %910
      %v912 = vpack.c.bf16 %v861, %v857
      %v913 = vpack.c.bf16 %v863, %v859
      %v914 = vpack.c.bf16 %v869, %v865
      %v915 = vpack.c.bf16 %v871, %v867
      %v916 = vpack.c.bf16 %v877, %v873
      %v917 = vpack.c.bf16 %v879, %v875
      %v918 = vpack.c.bf16 %v885, %v881
      %v919 = vpack.c.bf16 %v887, %v883
      %920 = vrot.lane.b32.xlu0 %v595, 120
      %v921 = vpop.permute.xlu0 %920
      %922 = vrot.lane.b32.xlu0 %v596, 120
      %v923 = vpop.permute.xlu0 %922
      %924 = vrot.lane.b32.xlu0 %v597, 120
      %v925 = vpop.permute.xlu0 %924
      %926 = vrot.lane.b32.xlu0 %v598, 120
      %v927 = vpop.permute.xlu0 %926
      %928 = vrot.lane.b32.xlu0 %v599, 120
      %v929 = vpop.permute.xlu0 %928
      %930 = vrot.lane.b32.xlu0 %v600, 120
      %v931 = vpop.permute.xlu0 %930
      %932 = vrot.lane.b32.xlu0 %v601, 120
      %v933 = vpop.permute.xlu0 %932
      %934 = vrot.lane.b32.xlu0 %v602, 120
      %v935 = vpop.permute.xlu0 %934
      %936 = vrot.lane.b32.xlu0 %v603, 120
      %v937 = vpop.permute.xlu0 %936
      %938 = vrot.lane.b32.xlu0 %v604, 120
      %v939 = vpop.permute.xlu0 %938
      %940 = vrot.lane.b32.xlu0 %v605, 120
      %v941 = vpop.permute.xlu0 %940
      %942 = vrot.lane.b32.xlu0 %v606, 120
      %v943 = vpop.permute.xlu0 %942
      %944 = vrot.lane.b32.xlu0 %v607, 120
      %v945 = vpop.permute.xlu0 %944
      %946 = vrot.lane.b32.xlu0 %v608, 120
      %v947 = vpop.permute.xlu0 %946
      %948 = vrot.lane.b32.xlu0 %v609, 120
      %v949 = vpop.permute.xlu0 %948
      %950 = vrot.lane.b32.xlu0 %v610, 120
      %v951 = vpop.permute.xlu0 %950
      %968 = vmatpush.bf16.msra.mxu0 %v935
      %969 = vmatpush.bf16.msra.mxu0 %v933
      %970 = vmatpush.bf16.msra.mxu0 %v931
      %971 = vmatpush.bf16.msra.mxu0 %v929
      %972 = vmatpush.bf16.msra.mxu0 %v927
      %973 = vmatpush.bf16.msra.mxu0 %v925
      %974 = vmatpush.bf16.msra.mxu0 %v923
      %975 = vmatpush.bf16.msra.mxu0 %v921
      %976 = vmatmul.bf16.gmra.mxu0 %v912
      %v977 = vpop.f32.mrf.mxu0
      %v978 = vadd.f32 0.0, %v977
      %v979 = vpop.f32.mrf.mxu0
      %v980 = vadd.f32 0.0, %v979
      %981 = vmatmul.bf16.gmra.mxu0 %v914
      %v982 = vpop.f32.mrf.mxu0
      %v983 = vadd.f32 0.0, %v982
      %v984 = vpop.f32.mrf.mxu0
      %v985 = vadd.f32 0.0, %v984
      %986 = vmatmul.bf16.gmra.mxu0 %v916
      %v987 = vpop.f32.mrf.mxu0
      %v988 = vadd.f32 0.0, %v987
      %v989 = vpop.f32.mrf.mxu0
      %v990 = vadd.f32 0.0, %v989
      %991 = vmatmul.bf16.gmra.mxu0 %v918
      %v992 = vpop.f32.mrf.mxu0
      %v993 = vadd.f32 0.0, %v992
      %v994 = vpop.f32.mrf.mxu0
      %v995 = vadd.f32 0.0, %v994
      %996 = vdwg.mxu0
      %997 = vmatpush.bf16.msra.mxu0 %v951
      %998 = vmatpush.bf16.msra.mxu0 %v949
      %999 = vmatpush.bf16.msra.mxu0 %v947
      %1000 = vmatpush.bf16.msra.mxu0 %v945
      %1001 = vmatpush.bf16.msra.mxu0 %v943
      %1002 = vmatpush.bf16.msra.mxu0 %v941
      %1003 = vmatpush.bf16.msra.mxu0 %v939
      %1004 = vmatpush.bf16.msra.mxu0 %v937
      %1005 = vmatmul.bf16.gmra.mxu0 %v913
      %v1006 = vpop.f32.mrf.mxu0
      %v1007 = vadd.f32 %v978, %v1006
      %v1008 = vpop.f32.mrf.mxu0
      %v1009 = vadd.f32 %v980, %v1008
      %1010 = vmatmul.bf16.gmra.mxu0 %v915
      %v1011 = vpop.f32.mrf.mxu0
      %v1012 = vadd.f32 %v983, %v1011
      %v1013 = vpop.f32.mrf.mxu0
      %v1014 = vadd.f32 %v985, %v1013
      %1015 = vmatmul.bf16.gmra.mxu0 %v917
      %v1016 = vpop.f32.mrf.mxu0
      %v1017 = vadd.f32 %v988, %v1016
      %v1018 = vpop.f32.mrf.mxu0
      %v1019 = vadd.f32 %v990, %v1018
      %1020 = vmatmul.bf16.gmra.mxu0 %v919
      %v1021 = vpop.f32.mrf.mxu0
      %v1022 = vadd.f32 %v993, %v1021
      %v1023 = vpop.f32.mrf.mxu0
      %v1024 = vadd.f32 %v995, %v1023
      %1025 = vdwg.mxu0
      %v1026 = vrcp.pop %v890
      %v1027 = vrcp.pop %v893
      %v1028 = vrcp.pop %v896
      %v1029 = vrcp.pop %v899
      %v1030 = vrcp.pop %v902
      %v1031 = vrcp.pop %v905
      %v1032 = vrcp.pop %v908
      %v1033 = vrcp.pop %v911
      %v1034 = vmul.f32 %v1007, %v1026
      %v1035 = vmul.f32 %v1009, %v1027
      %v1036 = vmul.f32 %v1012, %v1028
      %v1037 = vmul.f32 %v1014, %v1029
      %v1038 = vmul.f32 %v1017, %v1030
      %v1039 = vmul.f32 %v1019, %v1031
      %v1040 = vmul.f32 %v1022, %v1032
      %v1041 = vmul.f32 %v1024, %v1033
      %1042 = vrot.lane.b32.xlu0 %v703, 120
      %v1043 = vpop.permute.xlu0 %1042
      %v1045 = vadd.f32 %v1034, %v1043
      %v1046 = vadd.f32 %v1035, %v1043
      %v1047 = vadd.f32 %v1036, %v1043
      %v1048 = vadd.f32 %v1037, %v1043
      %v1049 = vadd.f32 %v1038, %v1043
      %v1050 = vadd.f32 %v1039, %v1043
      %v1051 = vadd.f32 %v1040, %v1043
      %v1052 = vadd.f32 %v1041, %v1043
      %1061 = vrot.lane.b32.xlu0 %v1045, 8
      %v1062 = vpop.permute.xlu0 %1061
      %1063 = vrot.lane.b32.xlu0 %v1046, 8
      %v1064 = vpop.permute.xlu0 %1063
      %1065 = vrot.lane.b32.xlu0 %v1047, 8
      %v1066 = vpop.permute.xlu0 %1065
      %1067 = vrot.lane.b32.xlu0 %v1048, 8
      %v1068 = vpop.permute.xlu0 %1067
      %1069 = vrot.lane.b32.xlu0 %v1049, 8
      %v1070 = vpop.permute.xlu0 %1069
      %1071 = vrot.lane.b32.xlu0 %v1050, 8
      %v1072 = vpop.permute.xlu0 %1071
      %1073 = vrot.lane.b32.xlu0 %v1051, 8
      %v1074 = vpop.permute.xlu0 %1073
      %1075 = vrot.lane.b32.xlu0 %v1052, 8
      %v1076 = vpop.permute.xlu0 %1075
      %vm1085 = vcmask 64512
      %v1086 = vsel %vm1085, %v705, %v1062
      %v1087 = vsel %vm1085, %v706, %v1064
      %v1088 = vsel %vm1085, %v707, %v1066
      %v1089 = vsel %vm1085, %v708, %v1068
      %v1090 = vsel %vm1085, %v709, %v1070
      %v1091 = vsel %vm1085, %v710, %v1072
      %v1092 = vsel %vm1085, %v711, %v1074
      %v1093 = vsel %vm1085, %v712, %v1076
      %vm1094 = vcmask 130048
      %1095 = vst.msk [vmem:[%s251] sm:$0xff] %vm1094, %v1086
      %1096 = vst.msk [vmem:[%s251 + $0x8] sm:$0xff] %vm1094, %v1087
      %1097 = vst.msk [vmem:[%s251 + $0x10] sm:$0xff] %vm1094, %v1088
      %1098 = vst.msk [vmem:[%s251 + $0x18] sm:$0xff] %vm1094, %v1089
      %1099 = vst.msk [vmem:[%s251 + $0x20] sm:$0xff] %vm1094, %v1090
      %1100 = vst.msk [vmem:[%s251 + $0x28] sm:$0xff] %vm1094, %v1091
      %1101 = vst.msk [vmem:[%s251 + $0x30] sm:$0xff] %vm1094, %v1092
      %1102 = vst.msk [vmem:[%s251 + $0x38] sm:$0xff] %vm1094, %v1093
      %s1103 = smul.u32 8, %s16
      %p1104 = scmp.lt.s32.totalorder %s1103, 31
      %s1105 = scalar_select %p1104, %s1103, 31
      %s1106 = smul.addr %s1105, 8
      %s1107 = scalar_lea.vmem %s5, %s1106
      // Predicated region
      $region41: #{resgat_forward.9} parent=39 // pred_check
        %p1108 = pneg %p149
      $region42: #{resgat_forward.9} parent=39 // pred_check_branch
        %1110 = sbr.rel (%p1108) target = $region44
      $region43: #{resgat_forward.9} parent=39 // pred_region
        %s1111 = smul.u32 8, %s16
      $region44: #{resgat_forward.9} parent=39 // pred_fallthru
        _
    $region40: #{resgat_forward.9} parent=5 // pred_fallthru
      _
    %p1112 = scmp.le.s32.totalorder 2, %s11
    // Predicated region
    $region45: #{resgat_forward.9} parent=5 // pred_check
      %p1113 = pneg %p1112
    $region46: #{resgat_forward.9} parent=5 // pred_check_branch
      %1115 = sbr.rel (%p1113) target = $region48
    $region47: #{resgat_forward.9} parent=5 // pred_region
      %s1116 = ssub.s32 %s11, 2
      // Predicated region
      $region49: #{resgat_forward.9} parent=47 // pred_check
        %p1117 = pneg %p155
      $region50: #{resgat_forward.9} parent=47 // pred_check_branch
        %1119 = sbr.rel (%p1117) target = $region52
      $region51: #{resgat_forward.9} parent=47 // pred_region
        %s1120 = smul.u32 8, %s17
        %p1121 = scmp.lt.s32.totalorder %s1120, 31
        %s1122 = scalar_select %p1121, %s1120, 31
        %s1123 = smul.addr %s1122, 8
        %s1124 = scalar_lea.vmem %s5, %s1123
      $region52: #{resgat_forward.9} parent=47 // pred_fallthru
        _
    $region48: #{resgat_forward.9} parent=5 // pred_fallthru
      _
  $region6: #{resgat_forward.9} parent=0 // loop_footer
    %s15 = sadd.s32 1, %s11
  $region7: #{resgat_forward.9} parent=0 // loop_footer_branch
    %10 = sbr.rel target = $region3
  $region8: #{resgat_forward.9} parent=0 // loop_exit
    _

</llo_original>
